<compile_context>
chip_gen: v5e
topology: v5e:2x2
jax: 0.10.0
libtpu: 0.0.40
codegen_flags: <defaults>
</compile_context>

<pallas_src>
import jax
import jax.numpy as jnp
from jax.experimental import pallas as pl
from jax.experimental.pallas import tpu as pltpu


# ----------------------------- fused forward kernel -------------------------
def fused_kernel(tok_ref, len_ref, xtab_ref, whh_ref,
                 w1s_ref, w1p_ref, b1_ref, w2_ref, b2_ref,
                 out_ref, xg_sc):
    B2 = len_ref.shape[0]        # 2*batch rows (seq rows | pep rows)
    H = whh_ref.shape[0]         # hidden dim
    N = xg_sc.shape[0]           # T * 2*batch
    T = N // B2
    Bh = B2 // 2
    V = xtab_ref.shape[0]        # combined vocab (vocab1 + vocab2)

    # ---- embedding lookup + input projection + bias: ONE MXU pass ----------
    # xg = onehot(tok) @ (emb @ W_ih + b)   (table pre-folded on host)
    # TODO(synk): for large vocabularies replace the one-hot matmul with a
    # gather of xtab rows (scalar-prefetched indices / manual DMA gather).
    tok = tok_ref[...]                                              # (N, 1) int32
    col = jax.lax.broadcasted_iota(jnp.int32, (N, V), 1)
    onehot = (col == tok).astype(jnp.float32)                       # (N, V)
    xg_sc[...] = jnp.dot(onehot, xtab_ref[...],
                         preferred_element_type=jnp.float32)        # (N, 4H)

    # ---- loop-invariant loads / masks (hoisted out of the recurrence) ------
    lens = len_ref[...]                                             # (B2, 1) int32
    whh = whh_ref[...]                                              # (H, 4H)
    lane = jax.lax.broadcasted_iota(jnp.int32, (B2, 4 * H), 1)
    g_mask = (lane >= 2 * H) & (lane < 3 * H)                       # g-gate lanes

    h0 = jnp.zeros((B2, H), jnp.float32)
    c0 = jnp.zeros((B2, H), jnp.float32)

    # ---- LSTM recurrence over time; h/c live in loop-carry vregs -----------
    def step(t, carry):
        h, c = carry
        i0 = pl.multiple_of(t * B2, B2)
        gates = xg_sc[pl.ds(i0, B2), :] + jnp.dot(
            h, whh, preferred_element_type=jnp.float32)             # (B2, 4H)
        # PyTorch gate order [i | f | g | o]: full-vreg sigmoid/tanh + lane select
        acts = jnp.where(g_mask, jnp.tanh(gates), jax.nn.sigmoid(gates))
        i_g = acts[:, 0 * H:1 * H]
        f_g = acts[:, 1 * H:2 * H]
        g_g = acts[:, 2 * H:3 * H]
        o_g = acts[:, 3 * H:4 * H]
        c_new = f_g * c + i_g * g_g
        h_new = o_g * jnp.tanh(c_new)
        # packed-sequence semantics: freeze state once t >= length(row)
        active = t < lens                                           # (B2, 1) bool
        c = jnp.where(active, c_new, c)
        h = jnp.where(active, h_new, h)
        return (h, c)

    h, _ = jax.lax.fori_loop(0, T, step, (h0, c0), unroll=True)

    # ---- fused MLP head directly on the carried hidden states ---------------
    seq_h = h[0:Bh, :]                                              # (Bh, H)
    pep_h = h[Bh:B2, :]                                             # (Bh, H)
    # concat([seq_h, pep_h], 1) @ W1  ==  seq_h @ W1[:H] + pep_h @ W1[H:]
    l1 = (jnp.dot(seq_h, w1s_ref[...], preferred_element_type=jnp.float32)
          + jnp.dot(pep_h, w1p_ref[...], preferred_element_type=jnp.float32)
          + b1_ref[...])
    l1 = jnp.where(l1 > 0.0, l1, 0.01 * l1)                         # LeakyReLU(0.01)
    score = jnp.dot(l1, w2_ref[...], preferred_element_type=jnp.float32) + b2_ref[...]
    out_ref[...] = jax.nn.sigmoid(score)


def _fused_call(tok, lens, xtab, w_hh, w1s, w1p, b1, w2, b2):
    N = tok.shape[0]            # T * 2B
    B2 = lens.shape[0]          # 2B
    H = w_hh.shape[0]
    tagset = w2.shape[1]
    Bh = B2 // 2

    return pl.pallas_call(
        fused_kernel,
        out_shape=jax.ShapeDtypeStruct((Bh, tagset), jnp.float32),
        in_specs=[pl.BlockSpec(memory_space=pltpu.MemorySpace.VMEM)
                  for _ in range(9)],
        out_specs=pl.BlockSpec(memory_space=pltpu.MemorySpace.VMEM),
        scratch_shapes=[
            pltpu.VMEM((N, 4 * H), jnp.float32),   # x @ W_ih + b for ALL timesteps
        ],
    )(tok, lens, xtab, w_hh, w1s, w1p, b1, w2, b2)


# ------------------------------- full forward --------------------------------
def _pad_time(tok, T):
    t0 = tok.shape[0]
    if t0 == T:
        return tok
    return jnp.pad(tok, ((0, T - t0), (0, 0)))


@jax.jit
def forward(params, inputs, sequences_len, input_pep, peptides_len):
    T = max(inputs.shape[0], input_pep.shape[0])
    Bh = inputs.shape[1]
    V1 = params["emb1"].shape[0]

    # Batch the two streams together; pep ids are offset into the combined
    # [emb1; emb2] table (pep pad token 0 -> row V1 == emb2 padding row == zeros).
    seq_tok = _pad_time(inputs, T)
    pep_tok = _pad_time(input_pep, T) + V1
    tok = jnp.concatenate([seq_tok, pep_tok], axis=1)               # (T, 2B)
    tok = tok.reshape(T * 2 * Bh, 1).astype(jnp.int32)              # (T*2B, 1)

    lens = jnp.concatenate([sequences_len, peptides_len])
    lens = lens.reshape(2 * Bh, 1).astype(jnp.int32)                # (2B, 1)

    return _fused_call(tok, lens, params["xtab"], params["w_hh"],
                       params["w1_seq"], params["w1_pep"], params["b1"],
                       params["w2"], params["b2"])


# ------------------------------ JAX reference --------------------------------
def _lstm_ref(x_emb, lengths, w_ih, w_hh, b):
    T, B, E = x_emb.shape
    H = w_hh.shape[0]

    def step(carry, xt_t):
        h, c = carry
        xt, t = xt_t
        gates = xt @ w_ih + h @ w_hh + b
        i = jax.nn.sigmoid(gates[:, :H])
        f = jax.nn.sigmoid(gates[:, H:2 * H])
        g = jnp.tanh(gates[:, 2 * H:3 * H])
        o = jax.nn.sigmoid(gates[:, 3 * H:])
        c_new = f * c + i * g
        h_new = o * jnp.tanh(c_new)
        m = (t < lengths)[:, None]
        return (jnp.where(m, h_new, h), jnp.where(m, c_new, c)), None

    (h, _), _ = jax.lax.scan(
        step,
        (jnp.zeros((B, H), jnp.float32), jnp.zeros((B, H), jnp.float32)),
        (x_emb, jnp.arange(T)),
    )
    return h


def _forward_ref(params, inputs, sequences_len, input_pep, peptides_len):
    emb_pep = params["emb2"][input_pep]
    emb_seq = params["emb1"][inputs]
    pep_h = _lstm_ref(emb_pep, peptides_len, params["w_ih"], params["w_hh"], params["b_lstm"])
    seq_h = _lstm_ref(emb_seq, sequences_len, params["w_ih"], params["w_hh"], params["b_lstm"])
    comb = jnp.concatenate([seq_h, pep_h], axis=1)
    w1 = jnp.concatenate([params["w1_seq"], params["w1_pep"]], axis=0)
    l1 = comb @ w1 + params["b1"]
    l1 = jnp.where(l1 > 0, l1, 0.01 * l1)
    return jax.nn.sigmoid(l1 @ params["w2"] + params["b2"])


# ------------------------------ param init -----------------------------------
def init_params(key, E, H, vocab, tagset, vocab2):
    ks = jax.random.split(key, 10)
    s_lstm = 1.0 / jnp.sqrt(H)
    s1 = 1.0 / jnp.sqrt(2 * H)
    s2 = 1.0 / jnp.sqrt(H // 2)

    emb1 = jax.random.normal(ks[0], (vocab, E), jnp.float32).at[0].set(0.0)   # padding_idx=0
    emb2 = jax.random.normal(ks[1], (vocab2, E), jnp.float32).at[0].set(0.0)  # padding_idx=0

    # nn.LSTM weights (stored transposed for the kernel: (E,4H), (H,4H))
    w_ih = jax.random.uniform(ks[2], (E, 4 * H), jnp.float32, -s_lstm, s_lstm)
    w_hh = jax.random.uniform(ks[3], (H, 4 * H), jnp.float32, -s_lstm, s_lstm)
    b_ih = jax.random.uniform(ks[4], (4 * H,), jnp.float32, -s_lstm, s_lstm)
    b_hh = jax.random.uniform(ks[5], (4 * H,), jnp.float32, -s_lstm, s_lstm)
    b_lstm = (b_ih + b_hh).reshape(1, 4 * H)

    w1 = jax.random.uniform(ks[6], (2 * H, H // 2), jnp.float32, -s1, s1)
    b1 = jax.random.uniform(ks[7], (1, H // 2), jnp.float32, -s1, s1)
    w2 = jax.random.uniform(ks[8], (H // 2, tagset), jnp.float32, -s2, s2)
    b2 = jax.random.uniform(ks[9], (1, tagset), jnp.float32, -s2, s2)

    # Pre-folded embedding+projection+bias table for the kernel:
    #   onehot(tok) @ xtab  ==  emb[tok] @ W_ih + (b_ih + b_hh)
    emb_cat = jnp.concatenate([emb1, emb2], axis=0)
    xtab = jnp.dot(emb_cat, w_ih, precision=jax.lax.Precision.HIGHEST) + b_lstm

    return dict(emb1=emb1, emb2=emb2,
                xtab=xtab,
                w_ih=w_ih, w_hh=w_hh, b_lstm=b_lstm,
                w1_seq=w1[:H], w1_pep=w1[H:],                     # pre-split: no lane concat
                b1=b1, w2=w2, b2=b2)


# --------------------------------- main ---------------------------------------
if __name__ == "__main__":
    E, H = 16, 32
    VOCAB, VOCAB2 = 20, 25
    TAGSET = 2
    B, T_SEQ, T_PEP = 4, 12, 8

    key = jax.random.PRNGKey(0)
    kp, k_seq, k_pep = jax.random.split(key, 3)
    params = init_params(kp, E, H, VOCAB, TAGSET, VOCAB2)

    # sorted (descending) lengths, as pack_padded_sequence expects
    sequences_len = jnp.array([12, 10, 7, 5], dtype=jnp.int32)
    peptides_len = jnp.array([8, 6, 4, 3], dtype=jnp.int32)

    inputs = jax.random.randint(k_seq, (T_SEQ, B), 1, VOCAB, dtype=jnp.int32)
    input_pep = jax.random.randint(k_pep, (T_PEP, B), 1, VOCAB2, dtype=jnp.int32)
    # zero (pad) tokens past each sequence's length
    t_seq = jnp.arange(T_SEQ)[:, None]
    t_pep = jnp.arange(T_PEP)[:, None]
    inputs = jnp.where(t_seq < sequences_len[None, :], inputs, 0)
    input_pep = jnp.where(t_pep < peptides_len[None, :], input_pep, 0)

    out = forward(params, inputs, sequences_len, input_pep, peptides_len)
    out = jax.block_until_ready(out)

    ref = _forward_ref(params, inputs, sequences_len, input_pep, peptides_len)
    assert out.shape == (B, TAGSET)
    assert jnp.allclose(out, ref, atol=1e-5, rtol=1e-5), (out, ref)

    print("KERNEL_OK")
</pallas_src>

<mosaic_0001>
module attributes {stable_mosaic.version = 11 : i64} {
  func.func @fused_kernel(%arg0: memref<96x1xi32, #tpu.memory_space<vmem>>, %arg1: memref<8x1xi32, #tpu.memory_space<vmem>>, %arg2: memref<45x128xf32, #tpu.memory_space<vmem>>, %arg3: memref<32x128xf32, #tpu.memory_space<vmem>>, %arg4: memref<32x16xf32, #tpu.memory_space<vmem>>, %arg5: memref<32x16xf32, #tpu.memory_space<vmem>>, %arg6: memref<1x16xf32, #tpu.memory_space<vmem>>, %arg7: memref<16x2xf32, #tpu.memory_space<vmem>>, %arg8: memref<1x2xf32, #tpu.memory_space<vmem>>, %arg9: memref<4x2xf32, #tpu.memory_space<vmem>>, %arg10: memref<96x128xf32, #tpu.memory_space<vmem>>) attributes {dimension_semantics = [], scalar_prefetch = 0 : i64, scratch_operands = 1 : i64, tpu.core_type = #tpu.core_type<tc>} {
    %c0 = arith.constant 0 : index
    %c0_0 = arith.constant 0 : index
    %0 = vector.load %arg0[%c0, %c0_0] : memref<96x1xi32, #tpu.memory_space<vmem>>, vector<96x1xi32>
    %1 = tpu.iota {dimensions = array<i32: 1>} : vector<96x45xi32>
    %2 = vector.broadcast %0 : vector<96x1xi32> to vector<96x45xi32>
    %3 = arith.cmpi eq, %1, %2 : vector<96x45xi32>
    %4 = arith.extui %3 : vector<96x45xi1> to vector<96x45xi32>
    %5 = arith.sitofp %4 : vector<96x45xi32> to vector<96x45xf32>
    %c0_1 = arith.constant 0 : index
    %c0_2 = arith.constant 0 : index
    %6 = vector.load %arg2[%c0_1, %c0_2] : memref<45x128xf32, #tpu.memory_space<vmem>>, vector<45x128xf32>
    %cst = arith.constant dense<0.000000e+00> : vector<96x128xf32>
    %7 = tpu.matmul %5, %6, %cst {dimension_numbers = #tpu.dot_dimension_numbers<[1], [0], [0], [1], [0, 0, 1, 1], [], []>} : vector<96x45xf32>, vector<45x128xf32>, vector<96x128xf32> -> vector<96x128xf32>
    %c0_3 = arith.constant 0 : index
    %c0_4 = arith.constant 0 : index
    %8 = vector.load %arg10[%c0_3, %c0_4] : memref<96x128xf32, #tpu.memory_space<vmem>>, vector<96x128xf32>
    tpu.vector_store %arg10[%c0_3, %c0_4], %7 {strides = array<i32>} : memref<96x128xf32, #tpu.memory_space<vmem>>, vector<96x128xf32>,
    %c0_5 = arith.constant 0 : index
    %c0_6 = arith.constant 0 : index
    %9 = vector.load %arg1[%c0_5, %c0_6] : memref<8x1xi32, #tpu.memory_space<vmem>>, vector<8x1xi32>
    %c0_7 = arith.constant 0 : index
    %c0_8 = arith.constant 0 : index
    %10 = vector.load %arg3[%c0_7, %c0_8] : memref<32x128xf32, #tpu.memory_space<vmem>>, vector<32x128xf32>
    %11 = tpu.iota {dimensions = array<i32: 1>} : vector<8x128xi32>
    %c64_i32 = arith.constant 64 : i32
    %12 = vector.broadcast %c64_i32 : i32 to vector<8x128xi32>
    %13 = arith.cmpi sge, %11, %12 : vector<8x128xi32>
    %c96_i32 = arith.constant 96 : i32
    %14 = vector.broadcast %c96_i32 : i32 to vector<8x128xi32>
    %15 = arith.cmpi slt, %11, %14 : vector<8x128xi32>
    %16 = arith.andi %13, %15 : vector<8x128xi1>
    %cst_9 = arith.constant 0.000000e+00 : f32
    %17 = vector.broadcast %cst_9 : f32 to vector<8x32xf32>
    %cst_10 = arith.constant 0.000000e+00 : f32
    %18 = vector.broadcast %cst_10 : f32 to vector<8x32xf32>
    %c0_i32 = arith.constant 0 : i32
    %c8_i32 = arith.constant 8 : i32
    %19 = arith.muli %c0_i32, %c8_i32 : i32
    %20 = tpu.assume_multiple %19, 8 : i32
    %21 = arith.index_cast %20 : i32 to index
    %c0_11 = arith.constant 0 : index
    %22 = vector.load %arg10[%21, %c0_11] : memref<96x128xf32, #tpu.memory_space<vmem>>, vector<8x128xf32>
    %cst_12 = arith.constant dense<0.000000e+00> : vector<8x128xf32>
    %23 = tpu.matmul %17, %10, %cst_12 {dimension_numbers = #tpu.dot_dimension_numbers<[1], [0], [0], [1], [0, 0, 1, 1], [], []>} : vector<8x32xf32>, vector<32x128xf32>, vector<8x128xf32> -> vector<8x128xf32>
    %24 = arith.addf %22, %23 : vector<8x128xf32>
    %25 = math.tanh %24 : vector<8x128xf32>
    %26 = arith.negf %24 : vector<8x128xf32>
    %27 = math.exp %26 : vector<8x128xf32>
    %cst_13 = arith.constant 1.000000e+00 : f32
    %28 = vector.broadcast %cst_13 : f32 to vector<8x128xf32>
    %29 = arith.addf %28, %27 : vector<8x128xf32>
    %30 = arith.divf %28, %29 : vector<8x128xf32>
    %31 = arith.select %16, %25, %30 : vector<8x128xi1>, vector<8x128xf32>
    %32 = vector.extract_strided_slice %31 {offsets = [0, 0], sizes = [8, 32], strides = [1, 1]} : vector<8x128xf32> to vector<8x32xf32>
    %33 = vector.extract_strided_slice %31 {offsets = [0, 32], sizes = [8, 32], strides = [1, 1]} : vector<8x128xf32> to vector<8x32xf32>
    %34 = vector.extract_strided_slice %31 {offsets = [0, 64], sizes = [8, 32], strides = [1, 1]} : vector<8x128xf32> to vector<8x32xf32>
    %35 = vector.extract_strided_slice %31 {offsets = [0, 96], sizes = [8, 32], strides = [1, 1]} : vector<8x128xf32> to vector<8x32xf32>
    %36 = arith.mulf %33, %18 : vector<8x32xf32>
    %37 = arith.mulf %32, %34 : vector<8x32xf32>
    %38 = arith.addf %36, %37 : vector<8x32xf32>
    %39 = math.tanh %38 : vector<8x32xf32>
    %40 = arith.mulf %35, %39 : vector<8x32xf32>
    %41 = vector.broadcast %c0_i32 : i32 to vector<8x1xi32>
    %42 = arith.cmpi slt, %41, %9 : vector<8x1xi32>
    %43 = vector.shape_cast %42 : vector<8x1xi1> to vector<8x1xi1>
    %44 = vector.broadcast %43 : vector<8x1xi1> to vector<8x32xi1>
    %45 = arith.select %44, %38, %18 : vector<8x32xi1>, vector<8x32xf32>
    %46 = vector.shape_cast %42 : vector<8x1xi1> to vector<8x1xi1>
    %47 = vector.broadcast %46 : vector<8x1xi1> to vector<8x32xi1>
    %48 = arith.select %47, %40, %17 : vector<8x32xi1>, vector<8x32xf32>
    %c1_i32 = arith.constant 1 : i32
    %c8_i32_14 = arith.constant 8 : i32
    %49 = arith.muli %c1_i32, %c8_i32_14 : i32
    %50 = tpu.assume_multiple %49, 8 : i32
    %51 = arith.index_cast %50 : i32 to index
    %c0_15 = arith.constant 0 : index
    %52 = vector.load %arg10[%51, %c0_15] : memref<96x128xf32, #tpu.memory_space<vmem>>, vector<8x128xf32>
    %cst_16 = arith.constant dense<0.000000e+00> : vector<8x128xf32>
    %53 = tpu.matmul %48, %10, %cst_16 {dimension_numbers = #tpu.dot_dimension_numbers<[1], [0], [0], [1], [0, 0, 1, 1], [], []>} : vector<8x32xf32>, vector<32x128xf32>, vector<8x128xf32> -> vector<8x128xf32>
    %54 = arith.addf %52, %53 : vector<8x128xf32>
    %55 = math.tanh %54 : vector<8x128xf32>
    %56 = arith.negf %54 : vector<8x128xf32>
    %57 = math.exp %56 : vector<8x128xf32>
    %cst_17 = arith.constant 1.000000e+00 : f32
    %58 = vector.broadcast %cst_17 : f32 to vector<8x128xf32>
    %59 = arith.addf %58, %57 : vector<8x128xf32>
    %60 = arith.divf %58, %59 : vector<8x128xf32>
    %61 = arith.select %16, %55, %60 : vector<8x128xi1>, vector<8x128xf32>
    %62 = vector.extract_strided_slice %61 {offsets = [0, 0], sizes = [8, 32], strides = [1, 1]} : vector<8x128xf32> to vector<8x32xf32>
    %63 = vector.extract_strided_slice %61 {offsets = [0, 32], sizes = [8, 32], strides = [1, 1]} : vector<8x128xf32> to vector<8x32xf32>
    %64 = vector.extract_strided_slice %61 {offsets = [0, 64], sizes = [8, 32], strides = [1, 1]} : vector<8x128xf32> to vector<8x32xf32>
    %65 = vector.extract_strided_slice %61 {offsets = [0, 96], sizes = [8, 32], strides = [1, 1]} : vector<8x128xf32> to vector<8x32xf32>
    %66 = arith.mulf %63, %45 : vector<8x32xf32>
    %67 = arith.mulf %62, %64 : vector<8x32xf32>
    %68 = arith.addf %66, %67 : vector<8x32xf32>
    %69 = math.tanh %68 : vector<8x32xf32>
    %70 = arith.mulf %65, %69 : vector<8x32xf32>
    %71 = vector.broadcast %c1_i32 : i32 to vector<8x1xi32>
    %72 = arith.cmpi slt, %71, %9 : vector<8x1xi32>
    %73 = vector.shape_cast %72 : vector<8x1xi1> to vector<8x1xi1>
    %74 = vector.broadcast %73 : vector<8x1xi1> to vector<8x32xi1>
    %75 = arith.select %74, %68, %45 : vector<8x32xi1>, vector<8x32xf32>
    %76 = vector.shape_cast %72 : vector<8x1xi1> to vector<8x1xi1>
    %77 = vector.broadcast %76 : vector<8x1xi1> to vector<8x32xi1>
    %78 = arith.select %77, %70, %48 : vector<8x32xi1>, vector<8x32xf32>
    %c2_i32 = arith.constant 2 : i32
    %c8_i32_18 = arith.constant 8 : i32
    %79 = arith.muli %c2_i32, %c8_i32_18 : i32
    %80 = tpu.assume_multiple %79, 8 : i32
    %81 = arith.index_cast %80 : i32 to index
    %c0_19 = arith.constant 0 : index
    %82 = vector.load %arg10[%81, %c0_19] : memref<96x128xf32, #tpu.memory_space<vmem>>, vector<8x128xf32>
    %cst_20 = arith.constant dense<0.000000e+00> : vector<8x128xf32>
    %83 = tpu.matmul %78, %10, %cst_20 {dimension_numbers = #tpu.dot_dimension_numbers<[1], [0], [0], [1], [0, 0, 1, 1], [], []>} : vector<8x32xf32>, vector<32x128xf32>, vector<8x128xf32> -> vector<8x128xf32>
    %84 = arith.addf %82, %83 : vector<8x128xf32>
    %85 = math.tanh %84 : vector<8x128xf32>
    %86 = arith.negf %84 : vector<8x128xf32>
    %87 = math.exp %86 : vector<8x128xf32>
    %cst_21 = arith.constant 1.000000e+00 : f32
    %88 = vector.broadcast %cst_21 : f32 to vector<8x128xf32>
    %89 = arith.addf %88, %87 : vector<8x128xf32>
    %90 = arith.divf %88, %89 : vector<8x128xf32>
    %91 = arith.select %16, %85, %90 : vector<8x128xi1>, vector<8x128xf32>
    %92 = vector.extract_strided_slice %91 {offsets = [0, 0], sizes = [8, 32], strides = [1, 1]} : vector<8x128xf32> to vector<8x32xf32>
    %93 = vector.extract_strided_slice %91 {offsets = [0, 32], sizes = [8, 32], strides = [1, 1]} : vector<8x128xf32> to vector<8x32xf32>
    %94 = vector.extract_strided_slice %91 {offsets = [0, 64], sizes = [8, 32], strides = [1, 1]} : vector<8x128xf32> to vector<8x32xf32>
    %95 = vector.extract_strided_slice %91 {offsets = [0, 96], sizes = [8, 32], strides = [1, 1]} : vector<8x128xf32> to vector<8x32xf32>
    %96 = arith.mulf %93, %75 : vector<8x32xf32>
    %97 = arith.mulf %92, %94 : vector<8x32xf32>
    %98 = arith.addf %96, %97 : vector<8x32xf32>
    %99 = math.tanh %98 : vector<8x32xf32>
    %100 = arith.mulf %95, %99 : vector<8x32xf32>
    %101 = vector.broadcast %c2_i32 : i32 to vector<8x1xi32>
    %102 = arith.cmpi slt, %101, %9 : vector<8x1xi32>
    %103 = vector.shape_cast %102 : vector<8x1xi1> to vector<8x1xi1>
    %104 = vector.broadcast %103 : vector<8x1xi1> to vector<8x32xi1>
    %105 = arith.select %104, %98, %75 : vector<8x32xi1>, vector<8x32xf32>
    %106 = vector.shape_cast %102 : vector<8x1xi1> to vector<8x1xi1>
    %107 = vector.broadcast %106 : vector<8x1xi1> to vector<8x32xi1>
    %108 = arith.select %107, %100, %78 : vector<8x32xi1>, vector<8x32xf32>
    %c3_i32 = arith.constant 3 : i32
    %c8_i32_22 = arith.constant 8 : i32
    %109 = arith.muli %c3_i32, %c8_i32_22 : i32
    %110 = tpu.assume_multiple %109, 8 : i32
    %111 = arith.index_cast %110 : i32 to index
    %c0_23 = arith.constant 0 : index
    %112 = vector.load %arg10[%111, %c0_23] : memref<96x128xf32, #tpu.memory_space<vmem>>, vector<8x128xf32>
    %cst_24 = arith.constant dense<0.000000e+00> : vector<8x128xf32>
    %113 = tpu.matmul %108, %10, %cst_24 {dimension_numbers = #tpu.dot_dimension_numbers<[1], [0], [0], [1], [0, 0, 1, 1], [], []>} : vector<8x32xf32>, vector<32x128xf32>, vector<8x128xf32> -> vector<8x128xf32>
    %114 = arith.addf %112, %113 : vector<8x128xf32>
    %115 = math.tanh %114 : vector<8x128xf32>
    %116 = arith.negf %114 : vector<8x128xf32>
    %117 = math.exp %116 : vector<8x128xf32>
    %cst_25 = arith.constant 1.000000e+00 : f32
    %118 = vector.broadcast %cst_25 : f32 to vector<8x128xf32>
    %119 = arith.addf %118, %117 : vector<8x128xf32>
    %120 = arith.divf %118, %119 : vector<8x128xf32>
    %121 = arith.select %16, %115, %120 : vector<8x128xi1>, vector<8x128xf32>
    %122 = vector.extract_strided_slice %121 {offsets = [0, 0], sizes = [8, 32], strides = [1, 1]} : vector<8x128xf32> to vector<8x32xf32>
    %123 = vector.extract_strided_slice %121 {offsets = [0, 32], sizes = [8, 32], strides = [1, 1]} : vector<8x128xf32> to vector<8x32xf32>
    %124 = vector.extract_strided_slice %121 {offsets = [0, 64], sizes = [8, 32], strides = [1, 1]} : vector<8x128xf32> to vector<8x32xf32>
    %125 = vector.extract_strided_slice %121 {offsets = [0, 96], sizes = [8, 32], strides = [1, 1]} : vector<8x128xf32> to vector<8x32xf32>
    %126 = arith.mulf %123, %105 : vector<8x32xf32>
    %127 = arith.mulf %122, %124 : vector<8x32xf32>
    %128 = arith.addf %126, %127 : vector<8x32xf32>
    %129 = math.tanh %128 : vector<8x32xf32>
    %130 = arith.mulf %125, %129 : vector<8x32xf32>
    %131 = vector.broadcast %c3_i32 : i32 to vector<8x1xi32>
    %132 = arith.cmpi slt, %131, %9 : vector<8x1xi32>
    %133 = vector.shape_cast %132 : vector<8x1xi1> to vector<8x1xi1>
    %134 = vector.broadcast %133 : vector<8x1xi1> to vector<8x32xi1>
    %135 = arith.select %134, %128, %105 : vector<8x32xi1>, vector<8x32xf32>
    %136 = vector.shape_cast %132 : vector<8x1xi1> to vector<8x1xi1>
    %137 = vector.broadcast %136 : vector<8x1xi1> to vector<8x32xi1>
    %138 = arith.select %137, %130, %108 : vector<8x32xi1>, vector<8x32xf32>
    %c4_i32 = arith.constant 4 : i32
    %c8_i32_26 = arith.constant 8 : i32
    %139 = arith.muli %c4_i32, %c8_i32_26 : i32
    %140 = tpu.assume_multiple %139, 8 : i32
    %141 = arith.index_cast %140 : i32 to index
    %c0_27 = arith.constant 0 : index
    %142 = vector.load %arg10[%141, %c0_27] : memref<96x128xf32, #tpu.memory_space<vmem>>, vector<8x128xf32>
    %cst_28 = arith.constant dense<0.000000e+00> : vector<8x128xf32>
    %143 = tpu.matmul %138, %10, %cst_28 {dimension_numbers = #tpu.dot_dimension_numbers<[1], [0], [0], [1], [0, 0, 1, 1], [], []>} : vector<8x32xf32>, vector<32x128xf32>, vector<8x128xf32> -> vector<8x128xf32>
    %144 = arith.addf %142, %143 : vector<8x128xf32>
    %145 = math.tanh %144 : vector<8x128xf32>
    %146 = arith.negf %144 : vector<8x128xf32>
    %147 = math.exp %146 : vector<8x128xf32>
    %cst_29 = arith.constant 1.000000e+00 : f32
    %148 = vector.broadcast %cst_29 : f32 to vector<8x128xf32>
    %149 = arith.addf %148, %147 : vector<8x128xf32>
    %150 = arith.divf %148, %149 : vector<8x128xf32>
    %151 = arith.select %16, %145, %150 : vector<8x128xi1>, vector<8x128xf32>
    %152 = vector.extract_strided_slice %151 {offsets = [0, 0], sizes = [8, 32], strides = [1, 1]} : vector<8x128xf32> to vector<8x32xf32>
    %153 = vector.extract_strided_slice %151 {offsets = [0, 32], sizes = [8, 32], strides = [1, 1]} : vector<8x128xf32> to vector<8x32xf32>
    %154 = vector.extract_strided_slice %151 {offsets = [0, 64], sizes = [8, 32], strides = [1, 1]} : vector<8x128xf32> to vector<8x32xf32>
    %155 = vector.extract_strided_slice %151 {offsets = [0, 96], sizes = [8, 32], strides = [1, 1]} : vector<8x128xf32> to vector<8x32xf32>
    %156 = arith.mulf %153, %135 : vector<8x32xf32>
    %157 = arith.mulf %152, %154 : vector<8x32xf32>
    %158 = arith.addf %156, %157 : vector<8x32xf32>
    %159 = math.tanh %158 : vector<8x32xf32>
    %160 = arith.mulf %155, %159 : vector<8x32xf32>
    %161 = vector.broadcast %c4_i32 : i32 to vector<8x1xi32>
    %162 = arith.cmpi slt, %161, %9 : vector<8x1xi32>
    %163 = vector.shape_cast %162 : vector<8x1xi1> to vector<8x1xi1>
    %164 = vector.broadcast %163 : vector<8x1xi1> to vector<8x32xi1>
    %165 = arith.select %164, %158, %135 : vector<8x32xi1>, vector<8x32xf32>
    %166 = vector.shape_cast %162 : vector<8x1xi1> to vector<8x1xi1>
    %167 = vector.broadcast %166 : vector<8x1xi1> to vector<8x32xi1>
    %168 = arith.select %167, %160, %138 : vector<8x32xi1>, vector<8x32xf32>
    %c5_i32 = arith.constant 5 : i32
    %c8_i32_30 = arith.constant 8 : i32
    %169 = arith.muli %c5_i32, %c8_i32_30 : i32
    %170 = tpu.assume_multiple %169, 8 : i32
    %171 = arith.index_cast %170 : i32 to index
    %c0_31 = arith.constant 0 : index
    %172 = vector.load %arg10[%171, %c0_31] : memref<96x128xf32, #tpu.memory_space<vmem>>, vector<8x128xf32>
    %cst_32 = arith.constant dense<0.000000e+00> : vector<8x128xf32>
    %173 = tpu.matmul %168, %10, %cst_32 {dimension_numbers = #tpu.dot_dimension_numbers<[1], [0], [0], [1], [0, 0, 1, 1], [], []>} : vector<8x32xf32>, vector<32x128xf32>, vector<8x128xf32> -> vector<8x128xf32>
    %174 = arith.addf %172, %173 : vector<8x128xf32>
    %175 = math.tanh %174 : vector<8x128xf32>
    %176 = arith.negf %174 : vector<8x128xf32>
    %177 = math.exp %176 : vector<8x128xf32>
    %cst_33 = arith.constant 1.000000e+00 : f32
    %178 = vector.broadcast %cst_33 : f32 to vector<8x128xf32>
    %179 = arith.addf %178, %177 : vector<8x128xf32>
    %180 = arith.divf %178, %179 : vector<8x128xf32>
    %181 = arith.select %16, %175, %180 : vector<8x128xi1>, vector<8x128xf32>
    %182 = vector.extract_strided_slice %181 {offsets = [0, 0], sizes = [8, 32], strides = [1, 1]} : vector<8x128xf32> to vector<8x32xf32>
    %183 = vector.extract_strided_slice %181 {offsets = [0, 32], sizes = [8, 32], strides = [1, 1]} : vector<8x128xf32> to vector<8x32xf32>
    %184 = vector.extract_strided_slice %181 {offsets = [0, 64], sizes = [8, 32], strides = [1, 1]} : vector<8x128xf32> to vector<8x32xf32>
    %185 = vector.extract_strided_slice %181 {offsets = [0, 96], sizes = [8, 32], strides = [1, 1]} : vector<8x128xf32> to vector<8x32xf32>
    %186 = arith.mulf %183, %165 : vector<8x32xf32>
    %187 = arith.mulf %182, %184 : vector<8x32xf32>
    %188 = arith.addf %186, %187 : vector<8x32xf32>
    %189 = math.tanh %188 : vector<8x32xf32>
    %190 = arith.mulf %185, %189 : vector<8x32xf32>
    %191 = vector.broadcast %c5_i32 : i32 to vector<8x1xi32>
    %192 = arith.cmpi slt, %191, %9 : vector<8x1xi32>
    %193 = vector.shape_cast %192 : vector<8x1xi1> to vector<8x1xi1>
    %194 = vector.broadcast %193 : vector<8x1xi1> to vector<8x32xi1>
    %195 = arith.select %194, %188, %165 : vector<8x32xi1>, vector<8x32xf32>
    %196 = vector.shape_cast %192 : vector<8x1xi1> to vector<8x1xi1>
    %197 = vector.broadcast %196 : vector<8x1xi1> to vector<8x32xi1>
    %198 = arith.select %197, %190, %168 : vector<8x32xi1>, vector<8x32xf32>
    %c6_i32 = arith.constant 6 : i32
    %c8_i32_34 = arith.constant 8 : i32
    %199 = arith.muli %c6_i32, %c8_i32_34 : i32
    %200 = tpu.assume_multiple %199, 8 : i32
    %201 = arith.index_cast %200 : i32 to index
    %c0_35 = arith.constant 0 : index
    %202 = vector.load %arg10[%201, %c0_35] : memref<96x128xf32, #tpu.memory_space<vmem>>, vector<8x128xf32>
    %cst_36 = arith.constant dense<0.000000e+00> : vector<8x128xf32>
    %203 = tpu.matmul %198, %10, %cst_36 {dimension_numbers = #tpu.dot_dimension_numbers<[1], [0], [0], [1], [0, 0, 1, 1], [], []>} : vector<8x32xf32>, vector<32x128xf32>, vector<8x128xf32> -> vector<8x128xf32>
    %204 = arith.addf %202, %203 : vector<8x128xf32>
    %205 = math.tanh %204 : vector<8x128xf32>
    %206 = arith.negf %204 : vector<8x128xf32>
    %207 = math.exp %206 : vector<8x128xf32>
    %cst_37 = arith.constant 1.000000e+00 : f32
    %208 = vector.broadcast %cst_37 : f32 to vector<8x128xf32>
    %209 = arith.addf %208, %207 : vector<8x128xf32>
    %210 = arith.divf %208, %209 : vector<8x128xf32>
    %211 = arith.select %16, %205, %210 : vector<8x128xi1>, vector<8x128xf32>
    %212 = vector.extract_strided_slice %211 {offsets = [0, 0], sizes = [8, 32], strides = [1, 1]} : vector<8x128xf32> to vector<8x32xf32>
    %213 = vector.extract_strided_slice %211 {offsets = [0, 32], sizes = [8, 32], strides = [1, 1]} : vector<8x128xf32> to vector<8x32xf32>
    %214 = vector.extract_strided_slice %211 {offsets = [0, 64], sizes = [8, 32], strides = [1, 1]} : vector<8x128xf32> to vector<8x32xf32>
    %215 = vector.extract_strided_slice %211 {offsets = [0, 96], sizes = [8, 32], strides = [1, 1]} : vector<8x128xf32> to vector<8x32xf32>
    %216 = arith.mulf %213, %195 : vector<8x32xf32>
    %217 = arith.mulf %212, %214 : vector<8x32xf32>
    %218 = arith.addf %216, %217 : vector<8x32xf32>
    %219 = math.tanh %218 : vector<8x32xf32>
    %220 = arith.mulf %215, %219 : vector<8x32xf32>
    %221 = vector.broadcast %c6_i32 : i32 to vector<8x1xi32>
    %222 = arith.cmpi slt, %221, %9 : vector<8x1xi32>
    %223 = vector.shape_cast %222 : vector<8x1xi1> to vector<8x1xi1>
    %224 = vector.broadcast %223 : vector<8x1xi1> to vector<8x32xi1>
    %225 = arith.select %224, %218, %195 : vector<8x32xi1>, vector<8x32xf32>
    %226 = vector.shape_cast %222 : vector<8x1xi1> to vector<8x1xi1>
    %227 = vector.broadcast %226 : vector<8x1xi1> to vector<8x32xi1>
    %228 = arith.select %227, %220, %198 : vector<8x32xi1>, vector<8x32xf32>
    %c7_i32 = arith.constant 7 : i32
    %c8_i32_38 = arith.constant 8 : i32
    %229 = arith.muli %c7_i32, %c8_i32_38 : i32
    %230 = tpu.assume_multiple %229, 8 : i32
    %231 = arith.index_cast %230 : i32 to index
    %c0_39 = arith.constant 0 : index
    %232 = vector.load %arg10[%231, %c0_39] : memref<96x128xf32, #tpu.memory_space<vmem>>, vector<8x128xf32>
    %cst_40 = arith.constant dense<0.000000e+00> : vector<8x128xf32>
    %233 = tpu.matmul %228, %10, %cst_40 {dimension_numbers = #tpu.dot_dimension_numbers<[1], [0], [0], [1], [0, 0, 1, 1], [], []>} : vector<8x32xf32>, vector<32x128xf32>, vector<8x128xf32> -> vector<8x128xf32>
    %234 = arith.addf %232, %233 : vector<8x128xf32>
    %235 = math.tanh %234 : vector<8x128xf32>
    %236 = arith.negf %234 : vector<8x128xf32>
    %237 = math.exp %236 : vector<8x128xf32>
    %cst_41 = arith.constant 1.000000e+00 : f32
    %238 = vector.broadcast %cst_41 : f32 to vector<8x128xf32>
    %239 = arith.addf %238, %237 : vector<8x128xf32>
    %240 = arith.divf %238, %239 : vector<8x128xf32>
    %241 = arith.select %16, %235, %240 : vector<8x128xi1>, vector<8x128xf32>
    %242 = vector.extract_strided_slice %241 {offsets = [0, 0], sizes = [8, 32], strides = [1, 1]} : vector<8x128xf32> to vector<8x32xf32>
    %243 = vector.extract_strided_slice %241 {offsets = [0, 32], sizes = [8, 32], strides = [1, 1]} : vector<8x128xf32> to vector<8x32xf32>
    %244 = vector.extract_strided_slice %241 {offsets = [0, 64], sizes = [8, 32], strides = [1, 1]} : vector<8x128xf32> to vector<8x32xf32>
    %245 = vector.extract_strided_slice %241 {offsets = [0, 96], sizes = [8, 32], strides = [1, 1]} : vector<8x128xf32> to vector<8x32xf32>
    %246 = arith.mulf %243, %225 : vector<8x32xf32>
    %247 = arith.mulf %242, %244 : vector<8x32xf32>
    %248 = arith.addf %246, %247 : vector<8x32xf32>
    %249 = math.tanh %248 : vector<8x32xf32>
    %250 = arith.mulf %245, %249 : vector<8x32xf32>
    %251 = vector.broadcast %c7_i32 : i32 to vector<8x1xi32>
    %252 = arith.cmpi slt, %251, %9 : vector<8x1xi32>
    %253 = vector.shape_cast %252 : vector<8x1xi1> to vector<8x1xi1>
    %254 = vector.broadcast %253 : vector<8x1xi1> to vector<8x32xi1>
    %255 = arith.select %254, %248, %225 : vector<8x32xi1>, vector<8x32xf32>
    %256 = vector.shape_cast %252 : vector<8x1xi1> to vector<8x1xi1>
    %257 = vector.broadcast %256 : vector<8x1xi1> to vector<8x32xi1>
    %258 = arith.select %257, %250, %228 : vector<8x32xi1>, vector<8x32xf32>
    %c8_i32_42 = arith.constant 8 : i32
    %c8_i32_43 = arith.constant 8 : i32
    %259 = arith.muli %c8_i32_42, %c8_i32_43 : i32
    %260 = tpu.assume_multiple %259, 8 : i32
    %261 = arith.index_cast %260 : i32 to index
    %c0_44 = arith.constant 0 : index
    %262 = vector.load %arg10[%261, %c0_44] : memref<96x128xf32, #tpu.memory_space<vmem>>, vector<8x128xf32>
    %cst_45 = arith.constant dense<0.000000e+00> : vector<8x128xf32>
    %263 = tpu.matmul %258, %10, %cst_45 {dimension_numbers = #tpu.dot_dimension_numbers<[1], [0], [0], [1], [0, 0, 1, 1], [], []>} : vector<8x32xf32>, vector<32x128xf32>, vector<8x128xf32> -> vector<8x128xf32>
    %264 = arith.addf %262, %263 : vector<8x128xf32>
    %265 = math.tanh %264 : vector<8x128xf32>
    %266 = arith.negf %264 : vector<8x128xf32>
    %267 = math.exp %266 : vector<8x128xf32>
    %cst_46 = arith.constant 1.000000e+00 : f32
    %268 = vector.broadcast %cst_46 : f32 to vector<8x128xf32>
    %269 = arith.addf %268, %267 : vector<8x128xf32>
    %270 = arith.divf %268, %269 : vector<8x128xf32>
    %271 = arith.select %16, %265, %270 : vector<8x128xi1>, vector<8x128xf32>
    %272 = vector.extract_strided_slice %271 {offsets = [0, 0], sizes = [8, 32], strides = [1, 1]} : vector<8x128xf32> to vector<8x32xf32>
    %273 = vector.extract_strided_slice %271 {offsets = [0, 32], sizes = [8, 32], strides = [1, 1]} : vector<8x128xf32> to vector<8x32xf32>
    %274 = vector.extract_strided_slice %271 {offsets = [0, 64], sizes = [8, 32], strides = [1, 1]} : vector<8x128xf32> to vector<8x32xf32>
    %275 = vector.extract_strided_slice %271 {offsets = [0, 96], sizes = [8, 32], strides = [1, 1]} : vector<8x128xf32> to vector<8x32xf32>
    %276 = arith.mulf %273, %255 : vector<8x32xf32>
    %277 = arith.mulf %272, %274 : vector<8x32xf32>
    %278 = arith.addf %276, %277 : vector<8x32xf32>
    %279 = math.tanh %278 : vector<8x32xf32>
    %280 = arith.mulf %275, %279 : vector<8x32xf32>
    %281 = vector.broadcast %c8_i32_42 : i32 to vector<8x1xi32>
    %282 = arith.cmpi slt, %281, %9 : vector<8x1xi32>
    %283 = vector.shape_cast %282 : vector<8x1xi1> to vector<8x1xi1>
    %284 = vector.broadcast %283 : vector<8x1xi1> to vector<8x32xi1>
    %285 = arith.select %284, %278, %255 : vector<8x32xi1>, vector<8x32xf32>
    %286 = vector.shape_cast %282 : vector<8x1xi1> to vector<8x1xi1>
    %287 = vector.broadcast %286 : vector<8x1xi1> to vector<8x32xi1>
    %288 = arith.select %287, %280, %258 : vector<8x32xi1>, vector<8x32xf32>
    %c9_i32 = arith.constant 9 : i32
    %c8_i32_47 = arith.constant 8 : i32
    %289 = arith.muli %c9_i32, %c8_i32_47 : i32
    %290 = tpu.assume_multiple %289, 8 : i32
    %291 = arith.index_cast %290 : i32 to index
    %c0_48 = arith.constant 0 : index
    %292 = vector.load %arg10[%291, %c0_48] : memref<96x128xf32, #tpu.memory_space<vmem>>, vector<8x128xf32>
    %cst_49 = arith.constant dense<0.000000e+00> : vector<8x128xf32>
    %293 = tpu.matmul %288, %10, %cst_49 {dimension_numbers = #tpu.dot_dimension_numbers<[1], [0], [0], [1], [0, 0, 1, 1], [], []>} : vector<8x32xf32>, vector<32x128xf32>, vector<8x128xf32> -> vector<8x128xf32>
    %294 = arith.addf %292, %293 : vector<8x128xf32>
    %295 = math.tanh %294 : vector<8x128xf32>
    %296 = arith.negf %294 : vector<8x128xf32>
    %297 = math.exp %296 : vector<8x128xf32>
    %cst_50 = arith.constant 1.000000e+00 : f32
    %298 = vector.broadcast %cst_50 : f32 to vector<8x128xf32>
    %299 = arith.addf %298, %297 : vector<8x128xf32>
    %300 = arith.divf %298, %299 : vector<8x128xf32>
    %301 = arith.select %16, %295, %300 : vector<8x128xi1>, vector<8x128xf32>
    %302 = vector.extract_strided_slice %301 {offsets = [0, 0], sizes = [8, 32], strides = [1, 1]} : vector<8x128xf32> to vector<8x32xf32>
    %303 = vector.extract_strided_slice %301 {offsets = [0, 32], sizes = [8, 32], strides = [1, 1]} : vector<8x128xf32> to vector<8x32xf32>
    %304 = vector.extract_strided_slice %301 {offsets = [0, 64], sizes = [8, 32], strides = [1, 1]} : vector<8x128xf32> to vector<8x32xf32>
    %305 = vector.extract_strided_slice %301 {offsets = [0, 96], sizes = [8, 32], strides = [1, 1]} : vector<8x128xf32> to vector<8x32xf32>
    %306 = arith.mulf %303, %285 : vector<8x32xf32>
    %307 = arith.mulf %302, %304 : vector<8x32xf32>
    %308 = arith.addf %306, %307 : vector<8x32xf32>
    %309 = math.tanh %308 : vector<8x32xf32>
    %310 = arith.mulf %305, %309 : vector<8x32xf32>
    %311 = vector.broadcast %c9_i32 : i32 to vector<8x1xi32>
    %312 = arith.cmpi slt, %311, %9 : vector<8x1xi32>
    %313 = vector.shape_cast %312 : vector<8x1xi1> to vector<8x1xi1>
    %314 = vector.broadcast %313 : vector<8x1xi1> to vector<8x32xi1>
    %315 = arith.select %314, %308, %285 : vector<8x32xi1>, vector<8x32xf32>
    %316 = vector.shape_cast %312 : vector<8x1xi1> to vector<8x1xi1>
    %317 = vector.broadcast %316 : vector<8x1xi1> to vector<8x32xi1>
    %318 = arith.select %317, %310, %288 : vector<8x32xi1>, vector<8x32xf32>
    %c10_i32 = arith.constant 10 : i32
    %c8_i32_51 = arith.constant 8 : i32
    %319 = arith.muli %c10_i32, %c8_i32_51 : i32
    %320 = tpu.assume_multiple %319, 8 : i32
    %321 = arith.index_cast %320 : i32 to index
    %c0_52 = arith.constant 0 : index
    %322 = vector.load %arg10[%321, %c0_52] : memref<96x128xf32, #tpu.memory_space<vmem>>, vector<8x128xf32>
    %cst_53 = arith.constant dense<0.000000e+00> : vector<8x128xf32>
    %323 = tpu.matmul %318, %10, %cst_53 {dimension_numbers = #tpu.dot_dimension_numbers<[1], [0], [0], [1], [0, 0, 1, 1], [], []>} : vector<8x32xf32>, vector<32x128xf32>, vector<8x128xf32> -> vector<8x128xf32>
    %324 = arith.addf %322, %323 : vector<8x128xf32>
    %325 = math.tanh %324 : vector<8x128xf32>
    %326 = arith.negf %324 : vector<8x128xf32>
    %327 = math.exp %326 : vector<8x128xf32>
    %cst_54 = arith.constant 1.000000e+00 : f32
    %328 = vector.broadcast %cst_54 : f32 to vector<8x128xf32>
    %329 = arith.addf %328, %327 : vector<8x128xf32>
    %330 = arith.divf %328, %329 : vector<8x128xf32>
    %331 = arith.select %16, %325, %330 : vector<8x128xi1>, vector<8x128xf32>
    %332 = vector.extract_strided_slice %331 {offsets = [0, 0], sizes = [8, 32], strides = [1, 1]} : vector<8x128xf32> to vector<8x32xf32>
    %333 = vector.extract_strided_slice %331 {offsets = [0, 32], sizes = [8, 32], strides = [1, 1]} : vector<8x128xf32> to vector<8x32xf32>
    %334 = vector.extract_strided_slice %331 {offsets = [0, 64], sizes = [8, 32], strides = [1, 1]} : vector<8x128xf32> to vector<8x32xf32>
    %335 = vector.extract_strided_slice %331 {offsets = [0, 96], sizes = [8, 32], strides = [1, 1]} : vector<8x128xf32> to vector<8x32xf32>
    %336 = arith.mulf %333, %315 : vector<8x32xf32>
    %337 = arith.mulf %332, %334 : vector<8x32xf32>
    %338 = arith.addf %336, %337 : vector<8x32xf32>
    %339 = math.tanh %338 : vector<8x32xf32>
    %340 = arith.mulf %335, %339 : vector<8x32xf32>
    %341 = vector.broadcast %c10_i32 : i32 to vector<8x1xi32>
    %342 = arith.cmpi slt, %341, %9 : vector<8x1xi32>
    %343 = vector.shape_cast %342 : vector<8x1xi1> to vector<8x1xi1>
    %344 = vector.broadcast %343 : vector<8x1xi1> to vector<8x32xi1>
    %345 = arith.select %344, %338, %315 : vector<8x32xi1>, vector<8x32xf32>
    %346 = vector.shape_cast %342 : vector<8x1xi1> to vector<8x1xi1>
    %347 = vector.broadcast %346 : vector<8x1xi1> to vector<8x32xi1>
    %348 = arith.select %347, %340, %318 : vector<8x32xi1>, vector<8x32xf32>
    %c11_i32 = arith.constant 11 : i32
    %c8_i32_55 = arith.constant 8 : i32
    %349 = arith.muli %c11_i32, %c8_i32_55 : i32
    %350 = tpu.assume_multiple %349, 8 : i32
    %351 = arith.index_cast %350 : i32 to index
    %c0_56 = arith.constant 0 : index
    %352 = vector.load %arg10[%351, %c0_56] : memref<96x128xf32, #tpu.memory_space<vmem>>, vector<8x128xf32>
    %cst_57 = arith.constant dense<0.000000e+00> : vector<8x128xf32>
    %353 = tpu.matmul %348, %10, %cst_57 {dimension_numbers = #tpu.dot_dimension_numbers<[1], [0], [0], [1], [0, 0, 1, 1], [], []>} : vector<8x32xf32>, vector<32x128xf32>, vector<8x128xf32> -> vector<8x128xf32>
    %354 = arith.addf %352, %353 : vector<8x128xf32>
    %355 = math.tanh %354 : vector<8x128xf32>
    %356 = arith.negf %354 : vector<8x128xf32>
    %357 = math.exp %356 : vector<8x128xf32>
    %cst_58 = arith.constant 1.000000e+00 : f32
    %358 = vector.broadcast %cst_58 : f32 to vector<8x128xf32>
    %359 = arith.addf %358, %357 : vector<8x128xf32>
    %360 = arith.divf %358, %359 : vector<8x128xf32>
    %361 = arith.select %16, %355, %360 : vector<8x128xi1>, vector<8x128xf32>
    %362 = vector.extract_strided_slice %361 {offsets = [0, 0], sizes = [8, 32], strides = [1, 1]} : vector<8x128xf32> to vector<8x32xf32>
    %363 = vector.extract_strided_slice %361 {offsets = [0, 32], sizes = [8, 32], strides = [1, 1]} : vector<8x128xf32> to vector<8x32xf32>
    %364 = vector.extract_strided_slice %361 {offsets = [0, 64], sizes = [8, 32], strides = [1, 1]} : vector<8x128xf32> to vector<8x32xf32>
    %365 = vector.extract_strided_slice %361 {offsets = [0, 96], sizes = [8, 32], strides = [1, 1]} : vector<8x128xf32> to vector<8x32xf32>
    %366 = arith.mulf %363, %345 : vector<8x32xf32>
    %367 = arith.mulf %362, %364 : vector<8x32xf32>
    %368 = arith.addf %366, %367 : vector<8x32xf32>
    %369 = math.tanh %368 : vector<8x32xf32>
    %370 = arith.mulf %365, %369 : vector<8x32xf32>
    %371 = vector.broadcast %c11_i32 : i32 to vector<8x1xi32>
    %372 = arith.cmpi slt, %371, %9 : vector<8x1xi32>
    %373 = vector.shape_cast %372 : vector<8x1xi1> to vector<8x1xi1>
    %374 = vector.broadcast %373 : vector<8x1xi1> to vector<8x32xi1>
    %375 = arith.select %374, %368, %345 : vector<8x32xi1>, vector<8x32xf32>
    %376 = vector.shape_cast %372 : vector<8x1xi1> to vector<8x1xi1>
    %377 = vector.broadcast %376 : vector<8x1xi1> to vector<8x32xi1>
    %378 = arith.select %377, %370, %348 : vector<8x32xi1>, vector<8x32xf32>
    %c12_i32 = arith.constant 12 : i32
    %379 = vector.extract_strided_slice %378 {offsets = [0, 0], sizes = [4, 32], strides = [1, 1]} : vector<8x32xf32> to vector<4x32xf32>
    %380 = vector.extract_strided_slice %378 {offsets = [4, 0], sizes = [4, 32], strides = [1, 1]} : vector<8x32xf32> to vector<4x32xf32>
    %c0_59 = arith.constant 0 : index
    %c0_60 = arith.constant 0 : index
    %381 = vector.load %arg4[%c0_59, %c0_60] : memref<32x16xf32, #tpu.memory_space<vmem>>, vector<32x16xf32>
    %cst_61 = arith.constant dense<0.000000e+00> : vector<4x16xf32>
    %382 = tpu.matmul %379, %381, %cst_61 {dimension_numbers = #tpu.dot_dimension_numbers<[1], [0], [0], [1], [0, 0, 1, 1], [], []>} : vector<4x32xf32>, vector<32x16xf32>, vector<4x16xf32> -> vector<4x16xf32>
    %c0_62 = arith.constant 0 : index
    %c0_63 = arith.constant 0 : index
    %383 = vector.load %arg5[%c0_62, %c0_63] : memref<32x16xf32, #tpu.memory_space<vmem>>, vector<32x16xf32>
    %cst_64 = arith.constant dense<0.000000e+00> : vector<4x16xf32>
    %384 = tpu.matmul %380, %383, %cst_64 {dimension_numbers = #tpu.dot_dimension_numbers<[1], [0], [0], [1], [0, 0, 1, 1], [], []>} : vector<4x32xf32>, vector<32x16xf32>, vector<4x16xf32> -> vector<4x16xf32>
    %385 = arith.addf %382, %384 : vector<4x16xf32>
    %c0_65 = arith.constant 0 : index
    %c0_66 = arith.constant 0 : index
    %386 = vector.load %arg6[%c0_65, %c0_66] : memref<1x16xf32, #tpu.memory_space<vmem>>, vector<1x16xf32>
    %387 = vector.broadcast %386 : vector<1x16xf32> to vector<4x16xf32>
    %388 = arith.addf %385, %387 : vector<4x16xf32>
    %cst_67 = arith.constant 0.000000e+00 : f32
    %389 = vector.broadcast %cst_67 : f32 to vector<4x16xf32>
    %390 = arith.cmpf ogt, %388, %389 : vector<4x16xf32>
    %cst_68 = arith.constant 0.00999999977 : f32
    %391 = vector.broadcast %cst_68 : f32 to vector<4x16xf32>
    %392 = arith.mulf %391, %388 : vector<4x16xf32>
    %393 = arith.select %390, %388, %392 : vector<4x16xi1>, vector<4x16xf32>
    %c0_69 = arith.constant 0 : index
    %c0_70 = arith.constant 0 : index
    %394 = vector.load %arg7[%c0_69, %c0_70] : memref<16x2xf32, #tpu.memory_space<vmem>>, vector<16x2xf32>
    %cst_71 = arith.constant dense<0.000000e+00> : vector<4x2xf32>
    %395 = tpu.matmul %393, %394, %cst_71 {dimension_numbers = #tpu.dot_dimension_numbers<[1], [0], [0], [1], [0, 0, 1, 1], [], []>} : vector<4x16xf32>, vector<16x2xf32>, vector<4x2xf32> -> vector<4x2xf32>
    %c0_72 = arith.constant 0 : index
    %c0_73 = arith.constant 0 : index
    %396 = vector.load %arg8[%c0_72, %c0_73] : memref<1x2xf32, #tpu.memory_space<vmem>>, vector<1x2xf32>
    %397 = vector.broadcast %396 : vector<1x2xf32> to vector<4x2xf32>
    %398 = arith.addf %395, %397 : vector<4x2xf32>
    %399 = arith.negf %398 : vector<4x2xf32>
    %400 = math.exp %399 : vector<4x2xf32>
    %cst_74 = arith.constant 1.000000e+00 : f32
    %401 = vector.broadcast %cst_74 : f32 to vector<4x2xf32>
    %402 = arith.addf %401, %400 : vector<4x2xf32>
    %403 = arith.divf %401, %402 : vector<4x2xf32>
    %c0_75 = arith.constant 0 : index
    %c0_76 = arith.constant 0 : index
    %404 = vector.load %arg9[%c0_75, %c0_76] : memref<4x2xf32, #tpu.memory_space<vmem>>, vector<4x2xf32>
    tpu.vector_store %arg9[%c0_75, %c0_76], %403 {strides = array<i32>} : memref<4x2xf32, #tpu.memory_space<vmem>>, vector<4x2xf32>,
    return
  }
}

</mosaic_0001>

<llo_original>
// kernel: forward.1
$region0: #{forward.1}
  #allocation0 [shape = 'u32[]', space=smem, size = 0x4, offset = 0x4, fixed_abs, tag = 'smem constant byte address 0x4 - core index']
  #allocation1 [shape = 'u32[72,128]{1,0:T(1,128)}', space=vmem, size = 0x9000, scoped, tag = 'internal scratch']
  #allocation2 [shape = 'f32[96,128]{1,0:T(8,128)}', space=vmem, size = 0xc000, scoped, tag = 'scratch operand']
  %s0 = inlined_call_operand.vmem [shape: s32[96,1], index: 0, kind: input, shape index: {}]
  %s1 = inlined_call_operand.vmem [shape: s32[8,1], index: 1, kind: input, shape index: {}]
  %s2 = inlined_call_operand.vmem [shape: f32[45,128], index: 2, kind: input, shape index: {}]
  %s3 = inlined_call_operand.vmem [shape: f32[32,128], index: 3, kind: input, shape index: {}]
  %s4 = inlined_call_operand.vmem [shape: f32[32,16], index: 4, kind: input, shape index: {}]
  %s5 = inlined_call_operand.vmem [shape: f32[32,16], index: 5, kind: input, shape index: {}]
  %s6 = inlined_call_operand.vmem [shape: f32[1,16], index: 6, kind: input, shape index: {}]
  %s7 = inlined_call_operand.vmem [shape: f32[16,2], index: 7, kind: input, shape index: {}]
  %s8 = inlined_call_operand.vmem [shape: f32[1,2], index: 8, kind: input, shape index: {}]
  %s9 = inlined_call_operand.vmem [shape: f32[4,2], index: 9, kind: output, shape index: {}]
  %s10 = sld [smem:[#allocation0]]
  $region46: #{forward.1} parent=0
    _
  %s12 = ssub.s32 1, %s10
  %s13 = scalar_select 0, %s12, %s10
  // Predicated region
  $region2: #{forward.1} parent=0 // pred_check
    _
  $region3: #{forward.1} parent=0 // pred_check_branch
    %15 = sbr.rel (0) target = $region5
  $region4: #{forward.1} parent=0 // pred_region
    _
  $region5: #{forward.1} parent=0 // pred_fallthru
    _
  // Predicated region
  $region6: #{forward.1} parent=0 // pred_check
    _
  $region7: #{forward.1} parent=0 // pred_check_branch
    %17 = sbr.rel (0) target = $region9
  $region8: #{forward.1} parent=0 // pred_region
    _
  $region9: #{forward.1} parent=0 // pred_fallthru
    _
  // Predicated region
  $region10: #{forward.1} parent=0 // pred_check
    _
  $region11: #{forward.1} parent=0 // pred_check_branch
    %19 = sbr.rel (0) target = $region13
  $region12: #{forward.1} parent=0 // pred_region
    _
  $region13: #{forward.1} parent=0 // pred_fallthru
    _
  // Predicated region
  $region14: #{forward.1} parent=0 // pred_check
    _
  $region15: #{forward.1} parent=0 // pred_check_branch
    %21 = sbr.rel (0) target = $region17
  $region16: #{forward.1} parent=0 // pred_region
    _
  $region17: #{forward.1} parent=0 // pred_fallthru
    _
  // Predicated region
  $region18: #{forward.1} parent=0 // pred_check
    _
  $region19: #{forward.1} parent=0 // pred_check_branch
    %23 = sbr.rel (0) target = $region21
  $region20: #{forward.1} parent=0 // pred_region
    _
  $region21: #{forward.1} parent=0 // pred_fallthru
    _
  // Predicated region
  $region22: #{forward.1} parent=0 // pred_check
    _
  $region23: #{forward.1} parent=0 // pred_check_branch
    %25 = sbr.rel (0) target = $region25
  $region24: #{forward.1} parent=0 // pred_region
    _
  $region25: #{forward.1} parent=0 // pred_fallthru
    _
  // Predicated region
  $region26: #{forward.1} parent=0 // pred_check
    _
  $region27: #{forward.1} parent=0 // pred_check_branch
    %27 = sbr.rel (0) target = $region29
  $region28: #{forward.1} parent=0 // pred_region
    _
  $region29: #{forward.1} parent=0 // pred_fallthru
    _
  // Predicated region
  $region30: #{forward.1} parent=0 // pred_check
    _
  $region31: #{forward.1} parent=0 // pred_check_branch
    %29 = sbr.rel (0) target = $region33
  $region32: #{forward.1} parent=0 // pred_region
    _
  $region33: #{forward.1} parent=0 // pred_fallthru
    _
  // Predicated region
  $region34: #{forward.1} parent=0 // pred_check
    _
  $region35: #{forward.1} parent=0 // pred_check_branch
    %31 = sbr.rel (0) target = $region37
  $region36: #{forward.1} parent=0 // pred_region
    _
  $region37: #{forward.1} parent=0 // pred_fallthru
    _
  %v32 = vld [vmem:[%s0] sm:$0xff]
  %v33 = vld [vmem:[%s0 + $0x8] sm:$0xff]
  %v34 = vld [vmem:[%s0 + $0x10] sm:$0xff]
  %v35 = vld [vmem:[%s0 + $0x18] sm:$0xff]
  %v36 = vld [vmem:[%s0 + $0x20] sm:$0xff]
  %v37 = vld [vmem:[%s0 + $0x28] sm:$0xff]
  %v38 = vld [vmem:[%s0 + $0x30] sm:$0xff]
  %v39 = vld [vmem:[%s0 + $0x38] sm:$0xff]
  %v40 = vld [vmem:[%s0 + $0x40] sm:$0xff]
  %v41 = vld [vmem:[%s0 + $0x48] sm:$0xff]
  %v42 = vld [vmem:[%s0 + $0x50] sm:$0xff]
  %v43 = vld [vmem:[%s0 + $0x58] sm:$0xff]
  %v44 = vlaneseq
  %v45 = vand.u32 %v44, 127
  %46 = vset.pattern.permute.xlu0 0
  %47 = vperm.xlu0 %46, %v32
  %v48 = vpop.permute.xlu0 %47
  %49 = vset.pattern.permute.xlu0 0
  %50 = vperm.xlu0 %49, %v33
  %v51 = vpop.permute.xlu0 %50
  %52 = vset.pattern.permute.xlu0 0
  %53 = vperm.xlu0 %52, %v34
  %v54 = vpop.permute.xlu0 %53
  %55 = vset.pattern.permute.xlu0 0
  %56 = vperm.xlu0 %55, %v35
  %v57 = vpop.permute.xlu0 %56
  %58 = vset.pattern.permute.xlu0 0
  %59 = vperm.xlu0 %58, %v36
  %v60 = vpop.permute.xlu0 %59
  %61 = vset.pattern.permute.xlu0 0
  %62 = vperm.xlu0 %61, %v37
  %v63 = vpop.permute.xlu0 %62
  %64 = vset.pattern.permute.xlu0 0
  %65 = vperm.xlu0 %64, %v38
  %v66 = vpop.permute.xlu0 %65
  %67 = vset.pattern.permute.xlu0 0
  %68 = vperm.xlu0 %67, %v39
  %v69 = vpop.permute.xlu0 %68
  %70 = vset.pattern.permute.xlu0 0
  %71 = vperm.xlu0 %70, %v40
  %v72 = vpop.permute.xlu0 %71
  %73 = vset.pattern.permute.xlu0 0
  %74 = vperm.xlu0 %73, %v41
  %v75 = vpop.permute.xlu0 %74
  %76 = vset.pattern.permute.xlu0 0
  %77 = vperm.xlu0 %76, %v42
  %v78 = vpop.permute.xlu0 %77
  %79 = vset.pattern.permute.xlu0 0
  %80 = vperm.xlu0 %79, %v43
  %v81 = vpop.permute.xlu0 %80
  %vm82 = vcmp.eq.s32.totalorder %v45, %v48
  %vm83 = vcmp.eq.s32.totalorder %v45, %v51
  %vm84 = vcmp.eq.s32.totalorder %v45, %v54
  %vm85 = vcmp.eq.s32.totalorder %v45, %v57
  %vm86 = vcmp.eq.s32.totalorder %v45, %v60
  %vm87 = vcmp.eq.s32.totalorder %v45, %v63
  %vm88 = vcmp.eq.s32.totalorder %v45, %v66
  %vm89 = vcmp.eq.s32.totalorder %v45, %v69
  %vm90 = vcmp.eq.s32.totalorder %v45, %v72
  %vm91 = vcmp.eq.s32.totalorder %v45, %v75
  %vm92 = vcmp.eq.s32.totalorder %v45, %v78
  %vm93 = vcmp.eq.s32.totalorder %v45, %v81
  %v94 = vsel %vm82, 1, 0
  %v95 = vsel %vm83, 1, 0
  %v96 = vsel %vm84, 1, 0
  %v97 = vsel %vm85, 1, 0
  %v98 = vsel %vm86, 1, 0
  %v99 = vsel %vm87, 1, 0
  %v100 = vsel %vm88, 1, 0
  %v101 = vsel %vm89, 1, 0
  %v102 = vsel %vm90, 1, 0
  %v103 = vsel %vm91, 1, 0
  %v104 = vsel %vm92, 1, 0
  %v105 = vsel %vm93, 1, 0
  %v106 = vcvt.s32.f32 %v94
  %v107 = vcvt.s32.f32 %v95
  %v108 = vcvt.s32.f32 %v96
  %v109 = vcvt.s32.f32 %v97
  %v110 = vcvt.s32.f32 %v98
  %v111 = vcvt.s32.f32 %v99
  %v112 = vcvt.s32.f32 %v100
  %v113 = vcvt.s32.f32 %v101
  %v114 = vcvt.s32.f32 %v102
  %v115 = vcvt.s32.f32 %v103
  %v116 = vcvt.s32.f32 %v104
  %v117 = vcvt.s32.f32 %v105
  %v118 = vld [vmem:[%s2] sm:$0xff]
  %v119 = vld [vmem:[%s2 + $0x8] sm:$0xff]
  %v120 = vld [vmem:[%s2 + $0x10] sm:$0xff]
  %v121 = vld [vmem:[%s2 + $0x18] sm:$0xff]
  %v122 = vld [vmem:[%s2 + $0x20] sm:$0xff]
  %v123 = vld [vmem:[%s2 + $0x28] sm:$0x1f]
  %vm124 = vcmask 367616
  %v126 = vsel %vm124, %v106, 0
  %v129 = vsel %vm124, %v107, 0
  %v132 = vsel %vm124, %v108, 0
  %v135 = vsel %vm124, %v109, 0
  %v138 = vsel %vm124, %v110, 0
  %v141 = vsel %vm124, %v111, 0
  %v144 = vsel %vm124, %v112, 0
  %v147 = vsel %vm124, %v113, 0
  %v150 = vsel %vm124, %v114, 0
  %v153 = vsel %vm124, %v115, 0
  %v156 = vsel %vm124, %v116, 0
  %v159 = vsel %vm124, %v117, 0
  %vm161 = vcmask 1044480
  %v163 = vsel %vm161, %v123, 0
  %165 = vmatpush.msra.mxu0 0.0
  %166 = vmatpush.msra.mxu0 0.0
  %167 = vmatpush.msra.mxu0 0.0
  %168 = vmatpush.msra.mxu0 0.0
  %169 = vmatpush.msra.mxu0 0.0
  %170 = vmatpush.msra.mxu0 0.0
  %171 = vmatpush.msra.mxu0 0.0
  %172 = vmatpush.msra.mxu0 0.0
  %173 = vmatpush.msra.mxu0 0.0
  %174 = vmatpush.msra.mxu0 0.0
  %175 = vmatpush.msra.mxu0 %v163
  %176 = vmatpush.msra.mxu0 %v122
  %177 = vmatpush.msra.mxu0 %v121
  %178 = vmatpush.msra.mxu0 %v120
  %179 = vmatpush.msra.mxu0 %v119
  %180 = vmatpush.msra.mxu0 %v118
  %181 = vmatmul.f32.gmra.mxu0 %v126
  %v182 = vpop.f32.mrf.mxu0
  %v183 = vadd.f32 0.0, %v182
  %184 = vmatmul.f32.gmra.mxu0 %v129
  %v185 = vpop.f32.mrf.mxu0
  %v186 = vadd.f32 0.0, %v185
  %187 = vmatmul.f32.gmra.mxu0 %v132
  %v188 = vpop.f32.mrf.mxu0
  %v189 = vadd.f32 0.0, %v188
  %190 = vmatmul.f32.gmra.mxu0 %v135
  %v191 = vpop.f32.mrf.mxu0
  %v192 = vadd.f32 0.0, %v191
  %193 = vmatmul.f32.gmra.mxu0 %v138
  %v194 = vpop.f32.mrf.mxu0
  %v195 = vadd.f32 0.0, %v194
  %196 = vmatmul.f32.gmra.mxu0 %v141
  %v197 = vpop.f32.mrf.mxu0
  %v198 = vadd.f32 0.0, %v197
  %199 = vmatmul.f32.gmra.mxu0 %v144
  %v200 = vpop.f32.mrf.mxu0
  %v201 = vadd.f32 0.0, %v200
  %202 = vmatmul.f32.gmra.mxu0 %v147
  %v203 = vpop.f32.mrf.mxu0
  %v204 = vadd.f32 0.0, %v203
  %205 = vmatmul.f32.gmra.mxu0 %v150
  %v206 = vpop.f32.mrf.mxu0
  %v207 = vadd.f32 0.0, %v206
  %208 = vmatmul.f32.gmra.mxu0 %v153
  %v209 = vpop.f32.mrf.mxu0
  %v210 = vadd.f32 0.0, %v209
  %211 = vmatmul.f32.gmra.mxu0 %v156
  %v212 = vpop.f32.mrf.mxu0
  %v213 = vadd.f32 0.0, %v212
  %214 = vmatmul.f32.gmra.mxu0 %v159
  %v215 = vpop.f32.mrf.mxu0
  %v216 = vadd.f32 0.0, %v215
  %217 = vdwg.mxu0
  %218 = vst [vmem:[#allocation2] sm:$0xff] %v183
  %219 = vst [vmem:[#allocation2 + $0x8] sm:$0xff] %v186
  %220 = vst [vmem:[#allocation2 + $0x10] sm:$0xff] %v189
  %221 = vst [vmem:[#allocation2 + $0x18] sm:$0xff] %v192
  %222 = vst [vmem:[#allocation2 + $0x20] sm:$0xff] %v195
  %223 = vst [vmem:[#allocation2 + $0x28] sm:$0xff] %v198
  %224 = vst [vmem:[#allocation2 + $0x30] sm:$0xff] %v201
  %225 = vst [vmem:[#allocation2 + $0x38] sm:$0xff] %v204
  %226 = vst [vmem:[#allocation2 + $0x40] sm:$0xff] %v207
  %227 = vst [vmem:[#allocation2 + $0x48] sm:$0xff] %v210
  %228 = vst [vmem:[#allocation2 + $0x50] sm:$0xff] %v213
  %229 = vst [vmem:[#allocation2 + $0x58] sm:$0xff] %v216
  %v230 = vld [vmem:[%s1] sm:$0xff]
  %v231 = vld [vmem:[%s3] sm:$0xff]
  %v232 = vld [vmem:[%s3 + $0x8] sm:$0xff]
  %v233 = vld [vmem:[%s3 + $0x10] sm:$0xff]
  %v234 = vld [vmem:[%s3 + $0x18] sm:$0xff]
  %vm235 = vcmp.ge.s32.totalorder %v45, 64
  %vm236 = vcmp.lt.s32.totalorder %v45, 96
  %vm237 = vmand %vm235, %vm236
  %v238 = vld [vmem:[#allocation2] sm:$0xff]
  %vm239 = vcmask 261120
  %v241 = vsel %vm239, 0.0, 0
  %243 = vmatpush.msra.mxu0 0.0
  %244 = vmatpush.msra.mxu0 0.0
  %245 = vmatpush.msra.mxu0 0.0
  %246 = vmatpush.msra.mxu0 0.0
  %247 = vmatpush.msra.mxu0 0.0
  %248 = vmatpush.msra.mxu0 0.0
  %249 = vmatpush.msra.mxu0 0.0
  %250 = vmatpush.msra.mxu0 0.0
  %251 = vmatpush.msra.mxu0 0.0
  %252 = vmatpush.msra.mxu0 0.0
  %253 = vmatpush.msra.mxu0 0.0
  %254 = vmatpush.msra.mxu0 0.0
  %255 = vmatpush.msra.mxu0 %v234
  %256 = vmatpush.msra.mxu0 %v233
  %257 = vmatpush.msra.mxu0 %v232
  %258 = vmatpush.msra.mxu0 %v231
  %259 = vmatmul.f32.gmra.mxu0 %v241
  %v260 = vpop.f32.mrf.mxu0
  %v261 = vadd.f32 0.0, %v260
  %262 = vdwg.mxu0
  %v263 = vadd.f32 %v238, %v261
  %v264 = vtanh.pop %v263
  %v265 = vxor.u32 %v263, 2147483648
  %v266 = vmul.f32 %v265, 1.442695
  %v267 = vpow.pop %v266
  %v268 = vadd.f32 %v267, 1.0
  %v269 = vrcp.pop %v268
  %v270 = vmul.f32 %v268, %v269
  %v271 = vsub.f32 1.0, %v270
  %v272 = vmul.f32 %v269, %v271
  %v273 = vadd.f32 %v269, %v272
  %vm274 = vweird.f32 %v268
  %vm275 = vweird.f32 %v269
  %vm276 = vmor %vm274, %vm275
  %v277 = vsel %vm276, %v269, %v273
  %v278 = vand.u32 2147483647, %v268
  %vm279 = vcmp.eq.f32.partialorder %v278, 8.507059e+37
  %v280 = vand.u32 %v268, 2147483648
  %v281 = vor.u32 1.1754944e-38, %v280
  %v282 = vsel %vm279, %v281, %v277
  %v283 = vmul.f32 1.0, %v282
  %v284 = vsel %vm237, %v264, %v283
  %v285 = vmul.f32 %v284, 0.0
  %287 = vrot.lane.b32.xlu0 %v284, 64
  %v288 = vpop.permute.xlu0 %287
  %v290 = vmul.f32 %v284, %v288
  %292 = vrot.lane.b32.xlu0 %v290, 32
  %v293 = vpop.permute.xlu0 %292
  %v295 = vadd.f32 %v285, %v293
  %v296 = vtanh.pop %v295
  %298 = vrot.lane.b32.xlu0 %v296, 64
  %v299 = vpop.permute.xlu0 %298
  %v301 = vmul.f32 %v284, %v299
  %vm302 = vcmp.gt.s32.totalorder %v230, 0
  %v303 = vsel %vm302, 1, 0
  %304 = vset.pattern.permute.xlu0 0
  %305 = vperm.xlu0 %304, %v303
  %v306 = vpop.permute.xlu0 %305
  %vm307 = vcmp.eq.s32.totalorder %v306, 1
  %v308 = vsel %vm307, %v295, 0.0
  %v309 = vsel %vm307, %v301, 0.0
  %s310 = scalar_lea.vmem [#allocation2], 8
  %v311 = vld [vmem:[%s310] sm:$0xff]
  %313 = vrot.lane.b32.xlu0 %v309, 32
  %v314 = vpop.permute.xlu0 %313
  %v315 = vsel %vm239, %v314, 0
  %317 = vmatpush.msra.mxu0 0.0
  %318 = vmatpush.msra.mxu0 0.0
  %319 = vmatpush.msra.mxu0 0.0
  %320 = vmatpush.msra.mxu0 0.0
  %321 = vmatpush.msra.mxu0 0.0
  %322 = vmatpush.msra.mxu0 0.0
  %323 = vmatpush.msra.mxu0 0.0
  %324 = vmatpush.msra.mxu0 0.0
  %325 = vmatpush.msra.mxu0 0.0
  %326 = vmatpush.msra.mxu0 0.0
  %327 = vmatpush.msra.mxu0 0.0
  %328 = vmatpush.msra.mxu0 0.0
  %329 = vmatpush.msra.mxu0 %v234
  %330 = vmatpush.msra.mxu0 %v233
  %331 = vmatpush.msra.mxu0 %v232
  %332 = vmatpush.msra.mxu0 %v231
  %333 = vmatmul.f32.gmra.mxu0 %v315
  %v334 = vpop.f32.mrf.mxu0
  %v335 = vadd.f32 0.0, %v334
  %336 = vdwg.mxu0
  %v337 = vadd.f32 %v311, %v335
  %v338 = vtanh.pop %v337
  %v339 = vxor.u32 %v337, 2147483648
  %v340 = vmul.f32 %v339, 1.442695
  %v341 = vpow.pop %v340
  %v342 = vadd.f32 %v341, 1.0
  %v343 = vrcp.pop %v342
  %v344 = vmul.f32 %v342, %v343
  %v345 = vsub.f32 1.0, %v344
  %v346 = vmul.f32 %v343, %v345
  %v347 = vadd.f32 %v343, %v346
  %vm348 = vweird.f32 %v342
  %vm349 = vweird.f32 %v343
  %vm350 = vmor %vm348, %vm349
  %v351 = vsel %vm350, %v343, %v347
  %v352 = vand.u32 2147483647, %v342
  %vm353 = vcmp.eq.f32.partialorder %v352, 8.507059e+37
  %v354 = vand.u32 %v342, 2147483648
  %v355 = vor.u32 1.1754944e-38, %v354
  %v356 = vsel %vm353, %v355, %v351
  %v357 = vmul.f32 1.0, %v356
  %v358 = vsel %vm237, %v338, %v357
  %v359 = vmul.f32 %v358, %v308
  %361 = vrot.lane.b32.xlu0 %v358, 64
  %v362 = vpop.permute.xlu0 %361
  %v364 = vmul.f32 %v358, %v362
  %366 = vrot.lane.b32.xlu0 %v364, 32
  %v367 = vpop.permute.xlu0 %366
  %v369 = vadd.f32 %v359, %v367
  %v370 = vtanh.pop %v369
  %372 = vrot.lane.b32.xlu0 %v370, 64
  %v373 = vpop.permute.xlu0 %372
  %v375 = vmul.f32 %v358, %v373
  %vm376 = vcmp.gt.s32.totalorder %v230, 1
  %v377 = vsel %vm376, 1, 0
  %378 = vset.pattern.permute.xlu0 0
  %379 = vperm.xlu0 %378, %v377
  %v380 = vpop.permute.xlu0 %379
  %vm381 = vcmp.eq.s32.totalorder %v380, 1
  %v382 = vsel %vm381, %v369, %v308
  %v383 = vsel %vm381, %v375, %v309
  %s384 = scalar_lea.vmem [#allocation2], 16
  %v385 = vld [vmem:[%s384] sm:$0xff]
  %387 = vrot.lane.b32.xlu0 %v383, 32
  %v388 = vpop.permute.xlu0 %387
  %v389 = vsel %vm239, %v388, 0
  %391 = vmatpush.msra.mxu0 0.0
  %392 = vmatpush.msra.mxu0 0.0
  %393 = vmatpush.msra.mxu0 0.0
  %394 = vmatpush.msra.mxu0 0.0
  %395 = vmatpush.msra.mxu0 0.0
  %396 = vmatpush.msra.mxu0 0.0
  %397 = vmatpush.msra.mxu0 0.0
  %398 = vmatpush.msra.mxu0 0.0
  %399 = vmatpush.msra.mxu0 0.0
  %400 = vmatpush.msra.mxu0 0.0
  %401 = vmatpush.msra.mxu0 0.0
  %402 = vmatpush.msra.mxu0 0.0
  %403 = vmatpush.msra.mxu0 %v234
  %404 = vmatpush.msra.mxu0 %v233
  %405 = vmatpush.msra.mxu0 %v232
  %406 = vmatpush.msra.mxu0 %v231
  %407 = vmatmul.f32.gmra.mxu0 %v389
  %v408 = vpop.f32.mrf.mxu0
  %v409 = vadd.f32 0.0, %v408
  %410 = vdwg.mxu0
  %v411 = vadd.f32 %v385, %v409
  %v412 = vtanh.pop %v411
  %v413 = vxor.u32 %v411, 2147483648
  %v414 = vmul.f32 %v413, 1.442695
  %v415 = vpow.pop %v414
  %v416 = vadd.f32 %v415, 1.0
  %v417 = vrcp.pop %v416
  %v418 = vmul.f32 %v416, %v417
  %v419 = vsub.f32 1.0, %v418
  %v420 = vmul.f32 %v417, %v419
  %v421 = vadd.f32 %v417, %v420
  %vm422 = vweird.f32 %v416
  %vm423 = vweird.f32 %v417
  %vm424 = vmor %vm422, %vm423
  %v425 = vsel %vm424, %v417, %v421
  %v426 = vand.u32 2147483647, %v416
  %vm427 = vcmp.eq.f32.partialorder %v426, 8.507059e+37
  %v428 = vand.u32 %v416, 2147483648
  %v429 = vor.u32 1.1754944e-38, %v428
  %v430 = vsel %vm427, %v429, %v425
  %v431 = vmul.f32 1.0, %v430
  %v432 = vsel %vm237, %v412, %v431
  %v433 = vmul.f32 %v432, %v382
  %435 = vrot.lane.b32.xlu0 %v432, 64
  %v436 = vpop.permute.xlu0 %435
  %v438 = vmul.f32 %v432, %v436
  %440 = vrot.lane.b32.xlu0 %v438, 32
  %v441 = vpop.permute.xlu0 %440
  %v443 = vadd.f32 %v433, %v441
  %v444 = vtanh.pop %v443
  %446 = vrot.lane.b32.xlu0 %v444, 64
  %v447 = vpop.permute.xlu0 %446
  %v449 = vmul.f32 %v432, %v447
  %vm450 = vcmp.gt.s32.totalorder %v230, 2
  %v451 = vsel %vm450, 1, 0
  %452 = vset.pattern.permute.xlu0 0
  %453 = vperm.xlu0 %452, %v451
  %v454 = vpop.permute.xlu0 %453
  %vm455 = vcmp.eq.s32.totalorder %v454, 1
  %v456 = vsel %vm455, %v443, %v382
  %v457 = vsel %vm455, %v449, %v383
  %s458 = scalar_lea.vmem [#allocation2], 24
  %v459 = vld [vmem:[%s458] sm:$0xff]
  %461 = vrot.lane.b32.xlu0 %v457, 32
  %v462 = vpop.permute.xlu0 %461
  %v463 = vsel %vm239, %v462, 0
  %465 = vmatpush.msra.mxu0 0.0
  %466 = vmatpush.msra.mxu0 0.0
  %467 = vmatpush.msra.mxu0 0.0
  %468 = vmatpush.msra.mxu0 0.0
  %469 = vmatpush.msra.mxu0 0.0
  %470 = vmatpush.msra.mxu0 0.0
  %471 = vmatpush.msra.mxu0 0.0
  %472 = vmatpush.msra.mxu0 0.0
  %473 = vmatpush.msra.mxu0 0.0
  %474 = vmatpush.msra.mxu0 0.0
  %475 = vmatpush.msra.mxu0 0.0
  %476 = vmatpush.msra.mxu0 0.0
  %477 = vmatpush.msra.mxu0 %v234
  %478 = vmatpush.msra.mxu0 %v233
  %479 = vmatpush.msra.mxu0 %v232
  %480 = vmatpush.msra.mxu0 %v231
  %481 = vmatmul.f32.gmra.mxu0 %v463
  %v482 = vpop.f32.mrf.mxu0
  %v483 = vadd.f32 0.0, %v482
  %484 = vdwg.mxu0
  %v485 = vadd.f32 %v459, %v483
  %v486 = vtanh.pop %v485
  %v487 = vxor.u32 %v485, 2147483648
  %v488 = vmul.f32 %v487, 1.442695
  %v489 = vpow.pop %v488
  %v490 = vadd.f32 %v489, 1.0
  %v491 = vrcp.pop %v490
  %v492 = vmul.f32 %v490, %v491
  %v493 = vsub.f32 1.0, %v492
  %v494 = vmul.f32 %v491, %v493
  %v495 = vadd.f32 %v491, %v494
  %vm496 = vweird.f32 %v490
  %vm497 = vweird.f32 %v491
  %vm498 = vmor %vm496, %vm497
  %v499 = vsel %vm498, %v491, %v495
  %v500 = vand.u32 2147483647, %v490
  %vm501 = vcmp.eq.f32.partialorder %v500, 8.507059e+37
  %v502 = vand.u32 %v490, 2147483648
  %v503 = vor.u32 1.1754944e-38, %v502
  %v504 = vsel %vm501, %v503, %v499
  %v505 = vmul.f32 1.0, %v504
  %v506 = vsel %vm237, %v486, %v505
  %v507 = vmul.f32 %v506, %v456
  %509 = vrot.lane.b32.xlu0 %v506, 64
  %v510 = vpop.permute.xlu0 %509
  %v512 = vmul.f32 %v506, %v510
  %514 = vrot.lane.b32.xlu0 %v512, 32
  %v515 = vpop.permute.xlu0 %514
  %v517 = vadd.f32 %v507, %v515
  %v518 = vtanh.pop %v517
  %520 = vrot.lane.b32.xlu0 %v518, 64
  %v521 = vpop.permute.xlu0 %520
  %v523 = vmul.f32 %v506, %v521
  %vm524 = vcmp.gt.s32.totalorder %v230, 3
  %v525 = vsel %vm524, 1, 0
  %526 = vset.pattern.permute.xlu0 0
  %527 = vperm.xlu0 %526, %v525
  %v528 = vpop.permute.xlu0 %527
  %vm529 = vcmp.eq.s32.totalorder %v528, 1
  %v530 = vsel %vm529, %v517, %v456
  %v531 = vsel %vm529, %v523, %v457
  %s532 = scalar_lea.vmem [#allocation2], 32
  %v533 = vld [vmem:[%s532] sm:$0xff]
  %535 = vrot.lane.b32.xlu0 %v531, 32
  %v536 = vpop.permute.xlu0 %535
  %v537 = vsel %vm239, %v536, 0
  %539 = vmatpush.msra.mxu0 0.0
  %540 = vmatpush.msra.mxu0 0.0
  %541 = vmatpush.msra.mxu0 0.0
  %542 = vmatpush.msra.mxu0 0.0
  %543 = vmatpush.msra.mxu0 0.0
  %544 = vmatpush.msra.mxu0 0.0
  %545 = vmatpush.msra.mxu0 0.0
  %546 = vmatpush.msra.mxu0 0.0
  %547 = vmatpush.msra.mxu0 0.0
  %548 = vmatpush.msra.mxu0 0.0
  %549 = vmatpush.msra.mxu0 0.0
  %550 = vmatpush.msra.mxu0 0.0
  %551 = vmatpush.msra.mxu0 %v234
  %552 = vmatpush.msra.mxu0 %v233
  %553 = vmatpush.msra.mxu0 %v232
  %554 = vmatpush.msra.mxu0 %v231
  %555 = vmatmul.f32.gmra.mxu0 %v537
  %v556 = vpop.f32.mrf.mxu0
  %v557 = vadd.f32 0.0, %v556
  %558 = vdwg.mxu0
  %v559 = vadd.f32 %v533, %v557
  %v560 = vtanh.pop %v559
  %v561 = vxor.u32 %v559, 2147483648
  %v562 = vmul.f32 %v561, 1.442695
  %v563 = vpow.pop %v562
  %v564 = vadd.f32 %v563, 1.0
  %v565 = vrcp.pop %v564
  %v566 = vmul.f32 %v564, %v565
  %v567 = vsub.f32 1.0, %v566
  %v568 = vmul.f32 %v565, %v567
  %v569 = vadd.f32 %v565, %v568
  %vm570 = vweird.f32 %v564
  %vm571 = vweird.f32 %v565
  %vm572 = vmor %vm570, %vm571
  %v573 = vsel %vm572, %v565, %v569
  %v574 = vand.u32 2147483647, %v564
  %vm575 = vcmp.eq.f32.partialorder %v574, 8.507059e+37
  %v576 = vand.u32 %v564, 2147483648
  %v577 = vor.u32 1.1754944e-38, %v576
  %v578 = vsel %vm575, %v577, %v573
  %v579 = vmul.f32 1.0, %v578
  %v580 = vsel %vm237, %v560, %v579
  %v581 = vmul.f32 %v580, %v530
  %583 = vrot.lane.b32.xlu0 %v580, 64
  %v584 = vpop.permute.xlu0 %583
  %v586 = vmul.f32 %v580, %v584
  %588 = vrot.lane.b32.xlu0 %v586, 32
  %v589 = vpop.permute.xlu0 %588
  %v591 = vadd.f32 %v581, %v589
  %v592 = vtanh.pop %v591
  %594 = vrot.lane.b32.xlu0 %v592, 64
  %v595 = vpop.permute.xlu0 %594
  %v597 = vmul.f32 %v580, %v595
  %vm598 = vcmp.gt.s32.totalorder %v230, 4
  %v599 = vsel %vm598, 1, 0
  %600 = vset.pattern.permute.xlu0 0
  %601 = vperm.xlu0 %600, %v599
  %v602 = vpop.permute.xlu0 %601
  %vm603 = vcmp.eq.s32.totalorder %v602, 1
  %v604 = vsel %vm603, %v591, %v530
  %v605 = vsel %vm603, %v597, %v531
  %s606 = scalar_lea.vmem [#allocation2], 40
  %v607 = vld [vmem:[%s606] sm:$0xff]
  %609 = vrot.lane.b32.xlu0 %v605, 32
  %v610 = vpop.permute.xlu0 %609
  %v611 = vsel %vm239, %v610, 0
  %613 = vmatpush.msra.mxu0 0.0
  %614 = vmatpush.msra.mxu0 0.0
  %615 = vmatpush.msra.mxu0 0.0
  %616 = vmatpush.msra.mxu0 0.0
  %617 = vmatpush.msra.mxu0 0.0
  %618 = vmatpush.msra.mxu0 0.0
  %619 = vmatpush.msra.mxu0 0.0
  %620 = vmatpush.msra.mxu0 0.0
  %621 = vmatpush.msra.mxu0 0.0
  %622 = vmatpush.msra.mxu0 0.0
  %623 = vmatpush.msra.mxu0 0.0
  %624 = vmatpush.msra.mxu0 0.0
  %625 = vmatpush.msra.mxu0 %v234
  %626 = vmatpush.msra.mxu0 %v233
  %627 = vmatpush.msra.mxu0 %v232
  %628 = vmatpush.msra.mxu0 %v231
  %629 = vmatmul.f32.gmra.mxu0 %v611
  %v630 = vpop.f32.mrf.mxu0
  %v631 = vadd.f32 0.0, %v630
  %632 = vdwg.mxu0
  %v633 = vadd.f32 %v607, %v631
  %v634 = vtanh.pop %v633
  %v635 = vxor.u32 %v633, 2147483648
  %v636 = vmul.f32 %v635, 1.442695
  %v637 = vpow.pop %v636
  %v638 = vadd.f32 %v637, 1.0
  %v639 = vrcp.pop %v638
  %v640 = vmul.f32 %v638, %v639
  %v641 = vsub.f32 1.0, %v640
  %v642 = vmul.f32 %v639, %v641
  %v643 = vadd.f32 %v639, %v642
  %vm644 = vweird.f32 %v638
  %vm645 = vweird.f32 %v639
  %vm646 = vmor %vm644, %vm645
  %v647 = vsel %vm646, %v639, %v643
  %v648 = vand.u32 2147483647, %v638
  %vm649 = vcmp.eq.f32.partialorder %v648, 8.507059e+37
  %v650 = vand.u32 %v638, 2147483648
  %v651 = vor.u32 1.1754944e-38, %v650
  %v652 = vsel %vm649, %v651, %v647
  %v653 = vmul.f32 1.0, %v652
  %v654 = vsel %vm237, %v634, %v653
  %v655 = vmul.f32 %v654, %v604
  %657 = vrot.lane.b32.xlu0 %v654, 64
  %v658 = vpop.permute.xlu0 %657
  %v660 = vmul.f32 %v654, %v658
  %662 = vrot.lane.b32.xlu0 %v660, 32
  %v663 = vpop.permute.xlu0 %662
  %v665 = vadd.f32 %v655, %v663
  %v666 = vtanh.pop %v665
  %668 = vrot.lane.b32.xlu0 %v666, 64
  %v669 = vpop.permute.xlu0 %668
  %v671 = vmul.f32 %v654, %v669
  %vm672 = vcmp.gt.s32.totalorder %v230, 5
  %v673 = vsel %vm672, 1, 0
  %674 = vset.pattern.permute.xlu0 0
  %675 = vperm.xlu0 %674, %v673
  %v676 = vpop.permute.xlu0 %675
  %vm677 = vcmp.eq.s32.totalorder %v676, 1
  %v678 = vsel %vm677, %v665, %v604
  %v679 = vsel %vm677, %v671, %v605
  %s680 = scalar_lea.vmem [#allocation2], 48
  %v681 = vld [vmem:[%s680] sm:$0xff]
  %683 = vrot.lane.b32.xlu0 %v679, 32
  %v684 = vpop.permute.xlu0 %683
  %v685 = vsel %vm239, %v684, 0
  %687 = vmatpush.msra.mxu0 0.0
  %688 = vmatpush.msra.mxu0 0.0
  %689 = vmatpush.msra.mxu0 0.0
  %690 = vmatpush.msra.mxu0 0.0
  %691 = vmatpush.msra.mxu0 0.0
  %692 = vmatpush.msra.mxu0 0.0
  %693 = vmatpush.msra.mxu0 0.0
  %694 = vmatpush.msra.mxu0 0.0
  %695 = vmatpush.msra.mxu0 0.0
  %696 = vmatpush.msra.mxu0 0.0
  %697 = vmatpush.msra.mxu0 0.0
  %698 = vmatpush.msra.mxu0 0.0
  %699 = vmatpush.msra.mxu0 %v234
  %700 = vmatpush.msra.mxu0 %v233
  %701 = vmatpush.msra.mxu0 %v232
  %702 = vmatpush.msra.mxu0 %v231
  %703 = vmatmul.f32.gmra.mxu0 %v685
  %v704 = vpop.f32.mrf.mxu0
  %v705 = vadd.f32 0.0, %v704
  %706 = vdwg.mxu0
  %v707 = vadd.f32 %v681, %v705
  %v708 = vtanh.pop %v707
  %v709 = vxor.u32 %v707, 2147483648
  %v710 = vmul.f32 %v709, 1.442695
  %v711 = vpow.pop %v710
  %v712 = vadd.f32 %v711, 1.0
  %v713 = vrcp.pop %v712
  %v714 = vmul.f32 %v712, %v713
  %v715 = vsub.f32 1.0, %v714
  %v716 = vmul.f32 %v713, %v715
  %v717 = vadd.f32 %v713, %v716
  %vm718 = vweird.f32 %v712
  %vm719 = vweird.f32 %v713
  %vm720 = vmor %vm718, %vm719
  %v721 = vsel %vm720, %v713, %v717
  %v722 = vand.u32 2147483647, %v712
  %vm723 = vcmp.eq.f32.partialorder %v722, 8.507059e+37
  %v724 = vand.u32 %v712, 2147483648
  %v725 = vor.u32 1.1754944e-38, %v724
  %v726 = vsel %vm723, %v725, %v721
  %v727 = vmul.f32 1.0, %v726
  %v728 = vsel %vm237, %v708, %v727
  %v729 = vmul.f32 %v728, %v678
  %731 = vrot.lane.b32.xlu0 %v728, 64
  %v732 = vpop.permute.xlu0 %731
  %v734 = vmul.f32 %v728, %v732
  %736 = vrot.lane.b32.xlu0 %v734, 32
  %v737 = vpop.permute.xlu0 %736
  %v739 = vadd.f32 %v729, %v737
  %v740 = vtanh.pop %v739
  %742 = vrot.lane.b32.xlu0 %v740, 64
  %v743 = vpop.permute.xlu0 %742
  %v745 = vmul.f32 %v728, %v743
  %vm746 = vcmp.gt.s32.totalorder %v230, 6
  %v747 = vsel %vm746, 1, 0
  %748 = vset.pattern.permute.xlu0 0
  %749 = vperm.xlu0 %748, %v747
  %v750 = vpop.permute.xlu0 %749
  %vm751 = vcmp.eq.s32.totalorder %v750, 1
  %v752 = vsel %vm751, %v739, %v678
  %v753 = vsel %vm751, %v745, %v679
  %s754 = scalar_lea.vmem [#allocation2], 56
  %v755 = vld [vmem:[%s754] sm:$0xff]
  %757 = vrot.lane.b32.xlu0 %v753, 32
  %v758 = vpop.permute.xlu0 %757
  %v759 = vsel %vm239, %v758, 0
  %761 = vmatpush.msra.mxu0 0.0
  %762 = vmatpush.msra.mxu0 0.0
  %763 = vmatpush.msra.mxu0 0.0
  %764 = vmatpush.msra.mxu0 0.0
  %765 = vmatpush.msra.mxu0 0.0
  %766 = vmatpush.msra.mxu0 0.0
  %767 = vmatpush.msra.mxu0 0.0
  %768 = vmatpush.msra.mxu0 0.0
  %769 = vmatpush.msra.mxu0 0.0
  %770 = vmatpush.msra.mxu0 0.0
  %771 = vmatpush.msra.mxu0 0.0
  %772 = vmatpush.msra.mxu0 0.0
  %773 = vmatpush.msra.mxu0 %v234
  %774 = vmatpush.msra.mxu0 %v233
  %775 = vmatpush.msra.mxu0 %v232
  %776 = vmatpush.msra.mxu0 %v231
  %777 = vmatmul.f32.gmra.mxu0 %v759
  %v778 = vpop.f32.mrf.mxu0
  %v779 = vadd.f32 0.0, %v778
  %780 = vdwg.mxu0
  %v781 = vadd.f32 %v755, %v779
  %v782 = vtanh.pop %v781
  %v783 = vxor.u32 %v781, 2147483648
  %v784 = vmul.f32 %v783, 1.442695
  %v785 = vpow.pop %v784
  %v786 = vadd.f32 %v785, 1.0
  %v787 = vrcp.pop %v786
  %v788 = vmul.f32 %v786, %v787
  %v789 = vsub.f32 1.0, %v788
  %v790 = vmul.f32 %v787, %v789
  %v791 = vadd.f32 %v787, %v790
  %vm792 = vweird.f32 %v786
  %vm793 = vweird.f32 %v787
  %vm794 = vmor %vm792, %vm793
  %v795 = vsel %vm794, %v787, %v791
  %v796 = vand.u32 2147483647, %v786
  %vm797 = vcmp.eq.f32.partialorder %v796, 8.507059e+37
  %v798 = vand.u32 %v786, 2147483648
  %v799 = vor.u32 1.1754944e-38, %v798
  %v800 = vsel %vm797, %v799, %v795
  %v801 = vmul.f32 1.0, %v800
  %v802 = vsel %vm237, %v782, %v801
  %v803 = vmul.f32 %v802, %v752
  %805 = vrot.lane.b32.xlu0 %v802, 64
  %v806 = vpop.permute.xlu0 %805
  %v808 = vmul.f32 %v802, %v806
  %810 = vrot.lane.b32.xlu0 %v808, 32
  %v811 = vpop.permute.xlu0 %810
  %v813 = vadd.f32 %v803, %v811
  %v814 = vtanh.pop %v813
  %816 = vrot.lane.b32.xlu0 %v814, 64
  %v817 = vpop.permute.xlu0 %816
  %v819 = vmul.f32 %v802, %v817
  %vm820 = vcmp.gt.s32.totalorder %v230, 7
  %v821 = vsel %vm820, 1, 0
  %822 = vset.pattern.permute.xlu0 0
  %823 = vperm.xlu0 %822, %v821
  %v824 = vpop.permute.xlu0 %823
  %vm825 = vcmp.eq.s32.totalorder %v824, 1
  %v826 = vsel %vm825, %v813, %v752
  %v827 = vsel %vm825, %v819, %v753
  %s828 = scalar_lea.vmem [#allocation2], 64
  %v829 = vld [vmem:[%s828] sm:$0xff]
  %831 = vrot.lane.b32.xlu0 %v827, 32
  %v832 = vpop.permute.xlu0 %831
  %v833 = vsel %vm239, %v832, 0
  %835 = vmatpush.msra.mxu0 0.0
  %836 = vmatpush.msra.mxu0 0.0
  %837 = vmatpush.msra.mxu0 0.0
  %838 = vmatpush.msra.mxu0 0.0
  %839 = vmatpush.msra.mxu0 0.0
  %840 = vmatpush.msra.mxu0 0.0
  %841 = vmatpush.msra.mxu0 0.0
  %842 = vmatpush.msra.mxu0 0.0
  %843 = vmatpush.msra.mxu0 0.0
  %844 = vmatpush.msra.mxu0 0.0
  %845 = vmatpush.msra.mxu0 0.0
  %846 = vmatpush.msra.mxu0 0.0
  %847 = vmatpush.msra.mxu0 %v234
  %848 = vmatpush.msra.mxu0 %v233
  %849 = vmatpush.msra.mxu0 %v232
  %850 = vmatpush.msra.mxu0 %v231
  %851 = vmatmul.f32.gmra.mxu0 %v833
  %v852 = vpop.f32.mrf.mxu0
  %v853 = vadd.f32 0.0, %v852
  %854 = vdwg.mxu0
  %v855 = vadd.f32 %v829, %v853
  %v856 = vtanh.pop %v855
  %v857 = vxor.u32 %v855, 2147483648
  %v858 = vmul.f32 %v857, 1.442695
  %v859 = vpow.pop %v858
  %v860 = vadd.f32 %v859, 1.0
  %v861 = vrcp.pop %v860
  %v862 = vmul.f32 %v860, %v861
  %v863 = vsub.f32 1.0, %v862
  %v864 = vmul.f32 %v861, %v863
  %v865 = vadd.f32 %v861, %v864
  %vm866 = vweird.f32 %v860
  %vm867 = vweird.f32 %v861
  %vm868 = vmor %vm866, %vm867
  %v869 = vsel %vm868, %v861, %v865
  %v870 = vand.u32 2147483647, %v860
  %vm871 = vcmp.eq.f32.partialorder %v870, 8.507059e+37
  %v872 = vand.u32 %v860, 2147483648
  %v873 = vor.u32 1.1754944e-38, %v872
  %v874 = vsel %vm871, %v873, %v869
  %v875 = vmul.f32 1.0, %v874
  %v876 = vsel %vm237, %v856, %v875
  %v877 = vmul.f32 %v876, %v826
  %879 = vrot.lane.b32.xlu0 %v876, 64
  %v880 = vpop.permute.xlu0 %879
  %v882 = vmul.f32 %v876, %v880
  %884 = vrot.lane.b32.xlu0 %v882, 32
  %v885 = vpop.permute.xlu0 %884
  %v887 = vadd.f32 %v877, %v885
  %v888 = vtanh.pop %v887
  %890 = vrot.lane.b32.xlu0 %v888, 64
  %v891 = vpop.permute.xlu0 %890
  %v893 = vmul.f32 %v876, %v891
  %vm894 = vcmp.gt.s32.totalorder %v230, 8
  %v895 = vsel %vm894, 1, 0
  %896 = vset.pattern.permute.xlu0 0
  %897 = vperm.xlu0 %896, %v895
  %v898 = vpop.permute.xlu0 %897
  %vm899 = vcmp.eq.s32.totalorder %v898, 1
  %v900 = vsel %vm899, %v887, %v826
  %v901 = vsel %vm899, %v893, %v827
  %s902 = scalar_lea.vmem [#allocation2], 72
  %v903 = vld [vmem:[%s902] sm:$0xff]
  %905 = vrot.lane.b32.xlu0 %v901, 32
  %v906 = vpop.permute.xlu0 %905
  %v907 = vsel %vm239, %v906, 0
  %909 = vmatpush.msra.mxu0 0.0
  %910 = vmatpush.msra.mxu0 0.0
  %911 = vmatpush.msra.mxu0 0.0
  %912 = vmatpush.msra.mxu0 0.0
  %913 = vmatpush.msra.mxu0 0.0
  %914 = vmatpush.msra.mxu0 0.0
  %915 = vmatpush.msra.mxu0 0.0
  %916 = vmatpush.msra.mxu0 0.0
  %917 = vmatpush.msra.mxu0 0.0
  %918 = vmatpush.msra.mxu0 0.0
  %919 = vmatpush.msra.mxu0 0.0
  %920 = vmatpush.msra.mxu0 0.0
  %921 = vmatpush.msra.mxu0 %v234
  %922 = vmatpush.msra.mxu0 %v233
  %923 = vmatpush.msra.mxu0 %v232
  %924 = vmatpush.msra.mxu0 %v231
  %925 = vmatmul.f32.gmra.mxu0 %v907
  %v926 = vpop.f32.mrf.mxu0
  %v927 = vadd.f32 0.0, %v926
  %928 = vdwg.mxu0
  %v929 = vadd.f32 %v903, %v927
  %v930 = vtanh.pop %v929
  %v931 = vxor.u32 %v929, 2147483648
  %v932 = vmul.f32 %v931, 1.442695
  %v933 = vpow.pop %v932
  %v934 = vadd.f32 %v933, 1.0
  %v935 = vrcp.pop %v934
  %v936 = vmul.f32 %v934, %v935
  %v937 = vsub.f32 1.0, %v936
  %v938 = vmul.f32 %v935, %v937
  %v939 = vadd.f32 %v935, %v938
  %vm940 = vweird.f32 %v934
  %vm941 = vweird.f32 %v935
  %vm942 = vmor %vm940, %vm941
  %v943 = vsel %vm942, %v935, %v939
  %v944 = vand.u32 2147483647, %v934
  %vm945 = vcmp.eq.f32.partialorder %v944, 8.507059e+37
  %v946 = vand.u32 %v934, 2147483648
  %v947 = vor.u32 1.1754944e-38, %v946
  %v948 = vsel %vm945, %v947, %v943
  %v949 = vmul.f32 1.0, %v948
  %v950 = vsel %vm237, %v930, %v949
  %v951 = vmul.f32 %v950, %v900
  %953 = vrot.lane.b32.xlu0 %v950, 64
  %v954 = vpop.permute.xlu0 %953
  %v956 = vmul.f32 %v950, %v954
  %958 = vrot.lane.b32.xlu0 %v956, 32
  %v959 = vpop.permute.xlu0 %958
  %v961 = vadd.f32 %v951, %v959
  %v962 = vtanh.pop %v961
  %964 = vrot.lane.b32.xlu0 %v962, 64
  %v965 = vpop.permute.xlu0 %964
  %v967 = vmul.f32 %v950, %v965
  %vm968 = vcmp.gt.s32.totalorder %v230, 9
  %v969 = vsel %vm968, 1, 0
  %970 = vset.pattern.permute.xlu0 0
  %971 = vperm.xlu0 %970, %v969
  %v972 = vpop.permute.xlu0 %971
  %vm973 = vcmp.eq.s32.totalorder %v972, 1
  %v974 = vsel %vm973, %v961, %v900
  %v975 = vsel %vm973, %v967, %v901
  %s976 = scalar_lea.vmem [#allocation2], 80
  %v977 = vld [vmem:[%s976] sm:$0xff]
  %979 = vrot.lane.b32.xlu0 %v975, 32
  %v980 = vpop.permute.xlu0 %979
  %v981 = vsel %vm239, %v980, 0
  %983 = vmatpush.msra.mxu0 0.0
  %984 = vmatpush.msra.mxu0 0.0
  %985 = vmatpush.msra.mxu0 0.0
  %986 = vmatpush.msra.mxu0 0.0
  %987 = vmatpush.msra.mxu0 0.0
  %988 = vmatpush.msra.mxu0 0.0
  %989 = vmatpush.msra.mxu0 0.0
  %990 = vmatpush.msra.mxu0 0.0
  %991 = vmatpush.msra.mxu0 0.0
  %992 = vmatpush.msra.mxu0 0.0
  %993 = vmatpush.msra.mxu0 0.0
  %994 = vmatpush.msra.mxu0 0.0
  %995 = vmatpush.msra.mxu0 %v234
  %996 = vmatpush.msra.mxu0 %v233
  %997 = vmatpush.msra.mxu0 %v232
  %998 = vmatpush.msra.mxu0 %v231
  %999 = vmatmul.f32.gmra.mxu0 %v981
  %v1000 = vpop.f32.mrf.mxu0
  %v1001 = vadd.f32 0.0, %v1000
  %1002 = vdwg.mxu0
  %v1003 = vadd.f32 %v977, %v1001
  %v1004 = vtanh.pop %v1003
  %v1005 = vxor.u32 %v1003, 2147483648
  %v1006 = vmul.f32 %v1005, 1.442695
  %v1007 = vpow.pop %v1006
  %v1008 = vadd.f32 %v1007, 1.0
  %v1009 = vrcp.pop %v1008
  %v1010 = vmul.f32 %v1008, %v1009
  %v1011 = vsub.f32 1.0, %v1010
  %v1012 = vmul.f32 %v1009, %v1011
  %v1013 = vadd.f32 %v1009, %v1012
  %vm1014 = vweird.f32 %v1008
  %vm1015 = vweird.f32 %v1009
  %vm1016 = vmor %vm1014, %vm1015
  %v1017 = vsel %vm1016, %v1009, %v1013
  %v1018 = vand.u32 2147483647, %v1008
  %vm1019 = vcmp.eq.f32.partialorder %v1018, 8.507059e+37
  %v1020 = vand.u32 %v1008, 2147483648
  %v1021 = vor.u32 1.1754944e-38, %v1020
  %v1022 = vsel %vm1019, %v1021, %v1017
  %v1023 = vmul.f32 1.0, %v1022
  %v1024 = vsel %vm237, %v1004, %v1023
  %v1025 = vmul.f32 %v1024, %v974
  %1027 = vrot.lane.b32.xlu0 %v1024, 64
  %v1028 = vpop.permute.xlu0 %1027
  %v1030 = vmul.f32 %v1024, %v1028
  %1032 = vrot.lane.b32.xlu0 %v1030, 32
  %v1033 = vpop.permute.xlu0 %1032
  %v1035 = vadd.f32 %v1025, %v1033
  %v1036 = vtanh.pop %v1035
  %1038 = vrot.lane.b32.xlu0 %v1036, 64
  %v1039 = vpop.permute.xlu0 %1038
  %v1041 = vmul.f32 %v1024, %v1039
  %vm1042 = vcmp.gt.s32.totalorder %v230, 10
  %v1043 = vsel %vm1042, 1, 0
  %1044 = vset.pattern.permute.xlu0 0
  %1045 = vperm.xlu0 %1044, %v1043
  %v1046 = vpop.permute.xlu0 %1045
  %vm1047 = vcmp.eq.s32.totalorder %v1046, 1
  %v1048 = vsel %vm1047, %v1035, %v974
  %v1049 = vsel %vm1047, %v1041, %v975
  %s1050 = scalar_lea.vmem [#allocation2], 88
  %v1051 = vld [vmem:[%s1050] sm:$0xff]
  %1053 = vrot.lane.b32.xlu0 %v1049, 32
  %v1054 = vpop.permute.xlu0 %1053
  %v1055 = vsel %vm239, %v1054, 0
  %1057 = vmatpush.msra.mxu0 0.0
  %1058 = vmatpush.msra.mxu0 0.0
  %1059 = vmatpush.msra.mxu0 0.0
  %1060 = vmatpush.msra.mxu0 0.0
  %1061 = vmatpush.msra.mxu0 0.0
  %1062 = vmatpush.msra.mxu0 0.0
  %1063 = vmatpush.msra.mxu0 0.0
  %1064 = vmatpush.msra.mxu0 0.0
  %1065 = vmatpush.msra.mxu0 0.0
  %1066 = vmatpush.msra.mxu0 0.0
  %1067 = vmatpush.msra.mxu0 0.0
  %1068 = vmatpush.msra.mxu0 0.0
  %1069 = vmatpush.msra.mxu0 %v234
  %1070 = vmatpush.msra.mxu0 %v233
  %1071 = vmatpush.msra.mxu0 %v232
  %1072 = vmatpush.msra.mxu0 %v231
  %1073 = vmatmul.f32.gmra.mxu0 %v1055
  %v1074 = vpop.f32.mrf.mxu0
  %v1075 = vadd.f32 0.0, %v1074
  %1076 = vdwg.mxu0
  %v1077 = vadd.f32 %v1051, %v1075
  %v1078 = vtanh.pop %v1077
  %v1079 = vxor.u32 %v1077, 2147483648
  %v1080 = vmul.f32 %v1079, 1.442695
  %v1081 = vpow.pop %v1080
  %v1082 = vadd.f32 %v1081, 1.0
  %v1083 = vrcp.pop %v1082
  %v1084 = vmul.f32 %v1082, %v1083
  %v1085 = vsub.f32 1.0, %v1084
  %v1086 = vmul.f32 %v1083, %v1085
  %v1087 = vadd.f32 %v1083, %v1086
  %vm1088 = vweird.f32 %v1082
  %vm1089 = vweird.f32 %v1083
  %vm1090 = vmor %vm1088, %vm1089
  %v1091 = vsel %vm1090, %v1083, %v1087
  %v1092 = vand.u32 2147483647, %v1082
  %vm1093 = vcmp.eq.f32.partialorder %v1092, 8.507059e+37
  %v1094 = vand.u32 %v1082, 2147483648
  %v1095 = vor.u32 1.1754944e-38, %v1094
  %v1096 = vsel %vm1093, %v1095, %v1091
  %v1097 = vmul.f32 1.0, %v1096
  %v1098 = vsel %vm237, %v1078, %v1097
  %v1099 = vmul.f32 %v1098, %v1048
  %1101 = vrot.lane.b32.xlu0 %v1098, 64
  %v1102 = vpop.permute.xlu0 %1101
  %v1104 = vmul.f32 %v1098, %v1102
  %1106 = vrot.lane.b32.xlu0 %v1104, 32
  %v1107 = vpop.permute.xlu0 %1106
  %v1109 = vadd.f32 %v1099, %v1107
  %v1110 = vtanh.pop %v1109
  %1112 = vrot.lane.b32.xlu0 %v1110, 64
  %v1113 = vpop.permute.xlu0 %1112
  %v1115 = vmul.f32 %v1098, %v1113
  %vm1116 = vcmp.gt.s32.totalorder %v230, 11
  %v1117 = vsel %vm1116, 1, 0
  %1118 = vset.pattern.permute.xlu0 0
  %1119 = vperm.xlu0 %1118, %v1117
  %v1120 = vpop.permute.xlu0 %1119
  %vm1121 = vcmp.eq.s32.totalorder %v1120, 1
  %v1122 = vsel %vm1121, %v1115, %v1049
  %v1123 = vld [vmem:[%s4] sm:$0xff]
  %v1124 = vld [vmem:[%s4 + $0x8] sm:$0xff]
  %v1125 = vld [vmem:[%s4 + $0x10] sm:$0xff]
  %v1126 = vld [vmem:[%s4 + $0x18] sm:$0xff]
  %v1127 = vld [vmem:[%s5] sm:$0xff]
  %v1128 = vld [vmem:[%s5 + $0x8] sm:$0xff]
  %v1129 = vld [vmem:[%s5 + $0x10] sm:$0xff]
  %v1130 = vld [vmem:[%s5 + $0x18] sm:$0xff]
  %v1132 = vrot.slane %v1122, 4
  %1133 = vrot.lane.b32.xlu0 %v1132, 32
  %v1134 = vpop.permute.xlu0 %1133
  %v1135 = vsel %vm239, %v1134, 0
  %1137 = vmatpush.msra.mxu0 0.0
  %1138 = vmatpush.msra.mxu0 0.0
  %1139 = vmatpush.msra.mxu0 0.0
  %1140 = vmatpush.msra.mxu0 0.0
  %1141 = vmatpush.msra.mxu0 0.0
  %1142 = vmatpush.msra.mxu0 0.0
  %1143 = vmatpush.msra.mxu0 0.0
  %1144 = vmatpush.msra.mxu0 0.0
  %1145 = vmatpush.msra.mxu0 0.0
  %1146 = vmatpush.msra.mxu0 0.0
  %1147 = vmatpush.msra.mxu0 0.0
  %1148 = vmatpush.msra.mxu0 0.0
  %1149 = vmatpush.msra.mxu0 %v1130
  %1150 = vmatpush.msra.mxu0 %v1129
  %1151 = vmatpush.msra.mxu0 %v1128
  %1152 = vmatpush.msra.mxu0 %v1127
  %1153 = vmatmul.f32.gmra.mxu0 %v1135
  %v1154 = vpop.f32.mrf.mxu0
  %v1155 = vadd.f32 0.0, %v1154
  %1156 = vdwg.mxu0
  %1157 = vrot.lane.b32.xlu0 %v1122, 32
  %v1158 = vpop.permute.xlu0 %1157
  %v1159 = vsel %vm239, %v1158, 0
  %1161 = vmatpush.msra.mxu0 0.0
  %1162 = vmatpush.msra.mxu0 0.0
  %1163 = vmatpush.msra.mxu0 0.0
  %1164 = vmatpush.msra.mxu0 0.0
  %1165 = vmatpush.msra.mxu0 0.0
  %1166 = vmatpush.msra.mxu0 0.0
  %1167 = vmatpush.msra.mxu0 0.0
  %1168 = vmatpush.msra.mxu0 0.0
  %1169 = vmatpush.msra.mxu0 0.0
  %1170 = vmatpush.msra.mxu0 0.0
  %1171 = vmatpush.msra.mxu0 0.0
  %1172 = vmatpush.msra.mxu0 0.0
  %1173 = vmatpush.msra.mxu0 %v1126
  %1174 = vmatpush.msra.mxu0 %v1125
  %1175 = vmatpush.msra.mxu0 %v1124
  %1176 = vmatpush.msra.mxu0 %v1123
  %1177 = vmatmul.f32.gmra.mxu0 %v1159
  %v1178 = vpop.f32.mrf.mxu0
  %v1179 = vadd.f32 %v1155, %v1178
  %1180 = vdwg.mxu0
  %v1181 = vld [vmem:[%s6] sm:$0x1]
  %v1183 = vperm.slane %v1181, 0
  %v1185 = vadd.f32 %v1179, %v1183
  %vm1186 = vcmp.gt.f32.partialorder %v1185, 0.0
  %v1187 = vmul.f32 %v1185, 0.01
  %v1188 = vsel %vm1186, %v1185, %v1187
  %v1189 = vld [vmem:[%s7] sm:$0xff]
  %v1190 = vld [vmem:[%s7 + $0x8] sm:$0xff]
  %v1191 = vld [vmem:[%s8] sm:$0x1]
  %v1193 = vperm.slane %v1191, 0
  %vm1195 = vcmask 130048
  %v1197 = vsel %vm1195, %v1188, 0
  %1199 = vmatpush.msra.mxu0 0.0
  %1200 = vmatpush.msra.mxu0 0.0
  %1201 = vmatpush.msra.mxu0 0.0
  %1202 = vmatpush.msra.mxu0 0.0
  %1203 = vmatpush.msra.mxu0 0.0
  %1204 = vmatpush.msra.mxu0 0.0
  %1205 = vmatpush.msra.mxu0 0.0
  %1206 = vmatpush.msra.mxu0 0.0
  %1207 = vmatpush.msra.mxu0 0.0
  %1208 = vmatpush.msra.mxu0 0.0
  %1209 = vmatpush.msra.mxu0 0.0
  %1210 = vmatpush.msra.mxu0 0.0
  %1211 = vmatpush.msra.mxu0 0.0
  %1212 = vmatpush.msra.mxu0 0.0
  %1213 = vmatpush.msra.mxu0 %v1190
  %1214 = vmatpush.msra.mxu0 %v1189
  %1215 = vmatmul.f32.gmra.mxu0 %v1197
  %v1216 = vpop.f32.mrf.mxu0
  %v1217 = vadd.f32 %v1193, %v1216
  %1218 = vdwg.mxu0
  %v1219 = vxor.u32 %v1217, 2147483648
  %v1220 = vmul.f32 %v1219, 1.442695
  %v1221 = vpow.pop %v1220
  %v1222 = vadd.f32 %v1221, 1.0
  %v1223 = vrcp.pop %v1222
  %v1224 = vmul.f32 %v1222, %v1223
  %v1225 = vsub.f32 1.0, %v1224
  %v1226 = vmul.f32 %v1223, %v1225
  %v1227 = vadd.f32 %v1223, %v1226
  %vm1228 = vweird.f32 %v1222
  %vm1229 = vweird.f32 %v1223
  %vm1230 = vmor %vm1228, %vm1229
  %v1231 = vsel %vm1230, %v1223, %v1227
  %v1232 = vand.u32 2147483647, %v1222
  %vm1233 = vcmp.eq.f32.partialorder %v1232, 8.507059e+37
  %v1234 = vand.u32 %v1222, 2147483648
  %v1235 = vor.u32 1.1754944e-38, %v1234
  %v1236 = vsel %vm1233, %v1235, %v1231
  %v1237 = vmul.f32 1.0, %v1236
  %vm1238 = vcmask 11264
  %1239 = vst.msk [vmem:[%s9] sm:$0xf] %vm1238, %v1237
  // Predicated region
  $region38: #{forward.1} parent=0 // pred_check
    _
  $region39: #{forward.1} parent=0 // pred_check_branch
    %1241 = sbr.rel (0) target = $region41
  $region40: #{forward.1} parent=0 // pred_region
    _
  $region41: #{forward.1} parent=0 // pred_fallthru
    _
  // Predicated region
  $region42: #{forward.1} parent=0 // pred_check
    _
  $region43: #{forward.1} parent=0 // pred_check_branch
    %1243 = sbr.rel (0) target = $region45
  $region44: #{forward.1} parent=0 // pred_region
    _
  $region45: #{forward.1} parent=0 // pred_fallthru
    _

</llo_original>
